<compile_context>
chip_gen: v5e
topology: v5e:2x2
jax: 0.10.0
libtpu: 0.0.40
codegen_flags: <defaults>
</compile_context>

<pallas_src>
import functools

import jax
import jax.numpy as jnp
import numpy as np
from jax.experimental import pallas as pl
from jax.experimental.pallas import tpu as pltpu


_VMEM = pl.BlockSpec(memory_space=pltpu.MemorySpace.VMEM)


# ------------------------------ fused kernel --------------------------------

def _fused_forward_kernel(p1_ref, w1_ref, w2_ref, w3_ref,
                          wfc1_ref, bfc1_ref, wfc2_ref, bfc2_ref,
                          q_ref, *, batch, act_dim, oh1, ow1, oh2, ow2, k2, s2):
    """Entire ConvDueling forward on VMEM-resident data.

    p1_ref : [B*oh1*ow1, C*8*8]  conv1 im2col patches, rows = (b, oh, ow),
                                 features in (c, kh, kw) order
    w1_ref : [C*8*8, 32]         conv1 weight (matching feature order)
    w2_ref : [k2*k2*32, 64]      conv2 weight, (kh, kw, c) feature order
    w3_ref : [oh2*ow2*64, 64]    conv3 weight, (kh, kw, c) feature order
    wfc1   : [64, 1024]          [v1_w | a1_w]
    bfc1   : [1, 1024]           [v1_b | a1_b]
    wfc2   : [1024, 1+A]         block-diag(v2_w, a2_w)
    bfc2   : [1, 1+A]            [v2_b | a2_b]
    q_ref  : [B, A]
    """
    f32 = jnp.float32

    # ---- conv1: im2col matmul + ReLU (MXU) ----
    h1 = jnp.dot(p1_ref[...], w1_ref[...], preferred_element_type=f32)
    h1 = jnp.maximum(h1, 0.0)                       # [B*oh1*ow1, 32]
    h1 = h1.reshape(batch, oh1 * ow1, 32)           # spatial (oh, ow) row-major

    # ---- conv2 (k2 x k2, stride s2) + ReLU, feeding conv3 patch assembly ----
    # For every conv2 output position, gather its k2 x k2 patch from the
    # VMEM-resident h1 with static sublane slices (k2 contiguous rows per
    # kernel row), matmul with the (kh, kw, c)-ordered weight and ReLU.
    # Concatenating the per-position outputs along lanes directly yields the
    # conv3 (3x3 -> 1x1) patch matrix in (i, j, c) feature order.
    w2 = w2_ref[...]
    h2_cols = []
    for i in range(oh2):
        for j in range(ow2):
            rows = []
            for kh in range(k2):
                r0 = (s2 * i + kh) * ow1 + s2 * j
                rows.append(h1[:, r0:r0 + k2, :])              # [B, k2, 32]
            patch = jnp.concatenate(rows, axis=1)              # [B, k2*k2, 32]
            patch = patch.reshape(batch, k2 * k2 * 32)         # (kh, kw, c)
            o = jnp.dot(patch, w2, preferred_element_type=f32)
            h2_cols.append(jnp.maximum(o, 0.0))                # [B, 64]
    p3 = jnp.concatenate(h2_cols, axis=1)                      # [B, oh2*ow2*64]

    # ---- conv3 (3x3, stride 1 -> 1x1 spatial) + ReLU ----
    feat = jnp.dot(p3, w3_ref[...], preferred_element_type=f32)
    feat = jnp.maximum(feat, 0.0)                              # [B, 64] == torch flatten

    # ---- fused value/advantage streams (heads concatenated) ----
    h_fc = jnp.dot(feat, wfc1_ref[...], preferred_element_type=f32) + bfc1_ref[...]
    h_fc = jnp.maximum(h_fc, 0.0)                              # [B, 1024]
    out2 = jnp.dot(h_fc, wfc2_ref[...], preferred_element_type=f32) + bfc2_ref[...]
    values = out2[:, 0:1]                                      # [B, 1]
    advantages = out2[:, 1:1 + act_dim]                        # [B, A]

    # ---- dueling combine: q = v + (a - mean(a)); global mean as in PyTorch ----
    mean_adv = jnp.mean(advantages, keepdims=True)             # [1, 1]
    q_ref[...] = values + (advantages - mean_adv)


# ------------------------------- wrappers ------------------------------------

def _im2col_conv1(x, kh, kw, stride):
    """Plain-JAX im2col on the raw network input (input prep only, no Pallas).

    Returns patches [B*OH*OW, C*kh*kw] with (c, kh, kw) feature order and
    (b, oh, ow) row order, plus (OH, OW).
    """
    B, C, H, W = x.shape
    OH = (H - kh) // stride + 1
    OW = (W - kw) // stride + 1
    cols = []
    for i in range(kh):
        for j in range(kw):
            cols.append(x[:, :, i:i + (OH - 1) * stride + 1:stride,
                                j:j + (OW - 1) * stride + 1:stride])  # [B,C,OH,OW]
    patches = jnp.stack(cols, axis=2)                          # [B, C, kh*kw, OH, OW]
    patches = patches.reshape(B, C * kh * kw, OH * OW)
    patches = patches.transpose(0, 2, 1).reshape(B * OH * OW, C * kh * kw)
    return patches, OH, OW


def conv_dueling_forward(x, params):
    """x: [B, C, H, W] float32 -> qvals [B, action_dim]; one fused pallas_call."""
    B = x.shape[0]
    act_dim = params["a2_b"].shape[0]

    # conv1 im2col on the raw input (only XLA-side layout prep in the graph).
    p1, oh1, ow1 = _im2col_conv1(x, 8, 8, 4)

    # conv2: 4x4 stride 2; conv3: 3x3 stride 1 must end at a 1x1 feature map.
    oh2, ow2 = (oh1 - 4) // 2 + 1, (ow1 - 4) // 2 + 1
    assert oh2 == 3 and ow2 == 3, "conv stack assumes a 1x1 final feature map"

    # Tiny one-time parameter packing (plain JAX, fused by XLA under jit).
    w1m = params["conv1_w"].reshape(32, -1).T                               # [C*64, 32]
    w2m = params["conv2_w"].transpose(2, 3, 1, 0).reshape(4 * 4 * 32, 64)   # (kh,kw,c)
    w3m = params["conv3_w"].transpose(2, 3, 1, 0).reshape(3 * 3 * 64, 64)   # (kh,kw,c)
    wfc1 = jnp.concatenate([params["v1_w"], params["a1_w"]], axis=1)        # [64, 1024]
    bfc1 = jnp.concatenate([params["v1_b"], params["a1_b"]]).reshape(1, -1) # [1, 1024]
    wfc2 = jnp.zeros((1024, 1 + act_dim), jnp.float32)
    wfc2 = wfc2.at[:512, 0:1].set(params["v2_w"])
    wfc2 = wfc2.at[512:, 1:].set(params["a2_w"])                            # block-diag
    bfc2 = jnp.concatenate([params["v2_b"], params["a2_b"]]).reshape(1, -1) # [1, 1+A]

    kernel = functools.partial(
        _fused_forward_kernel, batch=B, act_dim=act_dim,
        oh1=oh1, ow1=ow1, oh2=oh2, ow2=ow2, k2=4, s2=2)

    # TODO(synk): at training-scale batch sizes add a grid over the batch/row
    # axis with dimension_semantics=("parallel",) so v7x's two TensorCores get
    # work and im2col tiles respect its 64 MiB VMEM; at B=2 a single grid-less
    # block is optimal.
    return pl.pallas_call(
        kernel,
        out_shape=jax.ShapeDtypeStruct((B, act_dim), jnp.float32),
        in_specs=[_VMEM] * 8,
        out_specs=_VMEM,
    )(p1, w1m, w2m, w3m, wfc1, bfc1, wfc2, bfc2)


# ------------------------------ params / reference ---------------------------

def init_params(key, in_channels, feature_size, action_dim):
    ks = jax.random.split(key, 11)
    s = 0.05
    return {
        # conv weights in PyTorch [OC, IC, KH, KW] layout (no bias)
        "conv1_w": jax.random.normal(ks[0], (32, in_channels, 8, 8), jnp.float32) * s,
        "conv2_w": jax.random.normal(ks[1], (64, 32, 4, 4), jnp.float32) * s,
        "conv3_w": jax.random.normal(ks[2], (64, 64, 3, 3), jnp.float32) * s,
        # linear weights stored [in, out] (transposed vs PyTorch's [out, in])
        "v1_w": jax.random.normal(ks[3], (feature_size, 512), jnp.float32) * s,
        "v1_b": jax.random.normal(ks[4], (512,), jnp.float32) * s,
        "v2_w": jax.random.normal(ks[5], (512, 1), jnp.float32) * s,
        "v2_b": jax.random.normal(ks[6], (1,), jnp.float32) * s,
        "a1_w": jax.random.normal(ks[7], (feature_size, 512), jnp.float32) * s,
        "a1_b": jax.random.normal(ks[8], (512,), jnp.float32) * s,
        "a2_w": jax.random.normal(ks[9], (512, action_dim), jnp.float32) * s,
        "a2_b": jax.random.normal(ks[10], (action_dim,), jnp.float32) * s,
    }


def _reference_forward(x, p):
    hp = jax.lax.Precision.HIGHEST
    h = x
    for w, s in ((p["conv1_w"], 4), (p["conv2_w"], 2), (p["conv3_w"], 1)):
        h = jax.lax.conv_general_dilated(
            h, w, window_strides=(s, s), padding="VALID",
            dimension_numbers=("NCHW", "OIHW", "NCHW"), precision=hp)
        h = jnp.maximum(h, 0.0)
    feat = h.reshape(x.shape[0], -1)
    v = jnp.maximum(jnp.dot(feat, p["v1_w"], precision=hp) + p["v1_b"], 0.0)
    v = jnp.dot(v, p["v2_w"], precision=hp) + p["v2_b"]
    a = jnp.maximum(jnp.dot(feat, p["a1_w"], precision=hp) + p["a1_b"], 0.0)
    a = jnp.dot(a, p["a2_w"], precision=hp) + p["a2_b"]
    return v + (a - a.mean())


# ---------------------------------- main --------------------------------------

if __name__ == "__main__":
    B, C, H, W = 2, 4, 36, 36      # smallest spatial size valid for the conv stack
    action_dim = 6
    feature_size = 64 * 1 * 1      # 36 -> 8 -> 3 -> 1 spatial, 64 channels

    key = jax.random.PRNGKey(0)
    k_x, k_p = jax.random.split(key)
    x = jax.random.normal(k_x, (B, C, H, W), jnp.float32)
    params = init_params(k_p, C, feature_size, action_dim)

    fwd = jax.jit(conv_dueling_forward)
    q = jax.block_until_ready(fwd(x, params))
    assert q.shape == (B, action_dim)

    q_ref = jax.block_until_ready(_reference_forward(x, params))
    np.testing.assert_allclose(np.asarray(q), np.asarray(q_ref), rtol=2e-2, atol=2e-2)

    print("KERNEL_OK")
</pallas_src>

<mosaic_0001>
module attributes {stable_mosaic.version = 11 : i64} {
  func.func @_fused_forward_kernel(%arg0: memref<128x256xf32, #tpu.memory_space<vmem>>, %arg1: memref<256x32xf32, #tpu.memory_space<vmem>>, %arg2: memref<512x64xf32, #tpu.memory_space<vmem>>, %arg3: memref<576x64xf32, #tpu.memory_space<vmem>>, %arg4: memref<64x1024xf32, #tpu.memory_space<vmem>>, %arg5: memref<1x1024xf32, #tpu.memory_space<vmem>>, %arg6: memref<1024x7xf32, #tpu.memory_space<vmem>>, %arg7: memref<1x7xf32, #tpu.memory_space<vmem>>, %arg8: memref<2x6xf32, #tpu.memory_space<vmem>>) attributes {dimension_semantics = [], scalar_prefetch = 0 : i64, scratch_operands = 0 : i64, tpu.core_type = #tpu.core_type<tc>} {
    %c0 = arith.constant 0 : index
    %c0_0 = arith.constant 0 : index
    %0 = vector.load %arg0[%c0, %c0_0] : memref<128x256xf32, #tpu.memory_space<vmem>>, vector<128x256xf32>
    %c0_1 = arith.constant 0 : index
    %c0_2 = arith.constant 0 : index
    %1 = vector.load %arg1[%c0_1, %c0_2] : memref<256x32xf32, #tpu.memory_space<vmem>>, vector<256x32xf32>
    %cst = arith.constant dense<0.000000e+00> : vector<128x32xf32>
    %2 = tpu.matmul %0, %1, %cst {dimension_numbers = #tpu.dot_dimension_numbers<[1], [0], [0], [1], [0, 0, 1, 1], [], []>} : vector<128x256xf32>, vector<256x32xf32>, vector<128x32xf32> -> vector<128x32xf32>
    %cst_3 = arith.constant 0.000000e+00 : f32
    %3 = vector.broadcast %cst_3 : f32 to vector<128x32xf32>
    %4 = arith.maximumf %2, %3 : vector<128x32xf32>
    %5 = vector.shape_cast %4 : vector<128x32xf32> to vector<2x64x32xf32>
    %c0_4 = arith.constant 0 : index
    %c0_5 = arith.constant 0 : index
    %6 = vector.load %arg2[%c0_4, %c0_5] : memref<512x64xf32, #tpu.memory_space<vmem>>, vector<512x64xf32>
    %7 = vector.extract_strided_slice %5 {offsets = [0, 0, 0], sizes = [2, 4, 32], strides = [1, 1, 1]} : vector<2x64x32xf32> to vector<2x4x32xf32>
    %8 = vector.extract_strided_slice %5 {offsets = [0, 8, 0], sizes = [2, 4, 32], strides = [1, 1, 1]} : vector<2x64x32xf32> to vector<2x4x32xf32>
    %9 = vector.extract_strided_slice %5 {offsets = [0, 16, 0], sizes = [2, 4, 32], strides = [1, 1, 1]} : vector<2x64x32xf32> to vector<2x4x32xf32>
    %10 = vector.extract_strided_slice %5 {offsets = [0, 24, 0], sizes = [2, 4, 32], strides = [1, 1, 1]} : vector<2x64x32xf32> to vector<2x4x32xf32>
    %11 = tpu.concatenate %7, %8, %9, %10 in 1 : vector<2x4x32xf32>, vector<2x4x32xf32>, vector<2x4x32xf32>, vector<2x4x32xf32> -> vector<2x16x32xf32>
    %12 = vector.shape_cast %11 : vector<2x16x32xf32> to vector<2x512xf32>
    %cst_6 = arith.constant dense<0.000000e+00> : vector<2x64xf32>
    %13 = tpu.matmul %12, %6, %cst_6 {dimension_numbers = #tpu.dot_dimension_numbers<[1], [0], [0], [1], [0, 0, 1, 1], [], []>} : vector<2x512xf32>, vector<512x64xf32>, vector<2x64xf32> -> vector<2x64xf32>
    %cst_7 = arith.constant 0.000000e+00 : f32
    %14 = vector.broadcast %cst_7 : f32 to vector<2x64xf32>
    %15 = arith.maximumf %13, %14 : vector<2x64xf32>
    %16 = vector.extract_strided_slice %5 {offsets = [0, 2, 0], sizes = [2, 4, 32], strides = [1, 1, 1]} : vector<2x64x32xf32> to vector<2x4x32xf32>
    %17 = vector.extract_strided_slice %5 {offsets = [0, 10, 0], sizes = [2, 4, 32], strides = [1, 1, 1]} : vector<2x64x32xf32> to vector<2x4x32xf32>
    %18 = vector.extract_strided_slice %5 {offsets = [0, 18, 0], sizes = [2, 4, 32], strides = [1, 1, 1]} : vector<2x64x32xf32> to vector<2x4x32xf32>
    %19 = vector.extract_strided_slice %5 {offsets = [0, 26, 0], sizes = [2, 4, 32], strides = [1, 1, 1]} : vector<2x64x32xf32> to vector<2x4x32xf32>
    %20 = tpu.concatenate %16, %17, %18, %19 in 1 : vector<2x4x32xf32>, vector<2x4x32xf32>, vector<2x4x32xf32>, vector<2x4x32xf32> -> vector<2x16x32xf32>
    %21 = vector.shape_cast %20 : vector<2x16x32xf32> to vector<2x512xf32>
    %cst_8 = arith.constant dense<0.000000e+00> : vector<2x64xf32>
    %22 = tpu.matmul %21, %6, %cst_8 {dimension_numbers = #tpu.dot_dimension_numbers<[1], [0], [0], [1], [0, 0, 1, 1], [], []>} : vector<2x512xf32>, vector<512x64xf32>, vector<2x64xf32> -> vector<2x64xf32>
    %cst_9 = arith.constant 0.000000e+00 : f32
    %23 = vector.broadcast %cst_9 : f32 to vector<2x64xf32>
    %24 = arith.maximumf %22, %23 : vector<2x64xf32>
    %25 = vector.extract_strided_slice %5 {offsets = [0, 4, 0], sizes = [2, 4, 32], strides = [1, 1, 1]} : vector<2x64x32xf32> to vector<2x4x32xf32>
    %26 = vector.extract_strided_slice %5 {offsets = [0, 12, 0], sizes = [2, 4, 32], strides = [1, 1, 1]} : vector<2x64x32xf32> to vector<2x4x32xf32>
    %27 = vector.extract_strided_slice %5 {offsets = [0, 20, 0], sizes = [2, 4, 32], strides = [1, 1, 1]} : vector<2x64x32xf32> to vector<2x4x32xf32>
    %28 = vector.extract_strided_slice %5 {offsets = [0, 28, 0], sizes = [2, 4, 32], strides = [1, 1, 1]} : vector<2x64x32xf32> to vector<2x4x32xf32>
    %29 = tpu.concatenate %25, %26, %27, %28 in 1 : vector<2x4x32xf32>, vector<2x4x32xf32>, vector<2x4x32xf32>, vector<2x4x32xf32> -> vector<2x16x32xf32>
    %30 = vector.shape_cast %29 : vector<2x16x32xf32> to vector<2x512xf32>
    %cst_10 = arith.constant dense<0.000000e+00> : vector<2x64xf32>
    %31 = tpu.matmul %30, %6, %cst_10 {dimension_numbers = #tpu.dot_dimension_numbers<[1], [0], [0], [1], [0, 0, 1, 1], [], []>} : vector<2x512xf32>, vector<512x64xf32>, vector<2x64xf32> -> vector<2x64xf32>
    %cst_11 = arith.constant 0.000000e+00 : f32
    %32 = vector.broadcast %cst_11 : f32 to vector<2x64xf32>
    %33 = arith.maximumf %31, %32 : vector<2x64xf32>
    %34 = vector.extract_strided_slice %5 {offsets = [0, 16, 0], sizes = [2, 4, 32], strides = [1, 1, 1]} : vector<2x64x32xf32> to vector<2x4x32xf32>
    %35 = vector.extract_strided_slice %5 {offsets = [0, 24, 0], sizes = [2, 4, 32], strides = [1, 1, 1]} : vector<2x64x32xf32> to vector<2x4x32xf32>
    %36 = vector.extract_strided_slice %5 {offsets = [0, 32, 0], sizes = [2, 4, 32], strides = [1, 1, 1]} : vector<2x64x32xf32> to vector<2x4x32xf32>
    %37 = vector.extract_strided_slice %5 {offsets = [0, 40, 0], sizes = [2, 4, 32], strides = [1, 1, 1]} : vector<2x64x32xf32> to vector<2x4x32xf32>
    %38 = tpu.concatenate %34, %35, %36, %37 in 1 : vector<2x4x32xf32>, vector<2x4x32xf32>, vector<2x4x32xf32>, vector<2x4x32xf32> -> vector<2x16x32xf32>
    %39 = vector.shape_cast %38 : vector<2x16x32xf32> to vector<2x512xf32>
    %cst_12 = arith.constant dense<0.000000e+00> : vector<2x64xf32>
    %40 = tpu.matmul %39, %6, %cst_12 {dimension_numbers = #tpu.dot_dimension_numbers<[1], [0], [0], [1], [0, 0, 1, 1], [], []>} : vector<2x512xf32>, vector<512x64xf32>, vector<2x64xf32> -> vector<2x64xf32>
    %cst_13 = arith.constant 0.000000e+00 : f32
    %41 = vector.broadcast %cst_13 : f32 to vector<2x64xf32>
    %42 = arith.maximumf %40, %41 : vector<2x64xf32>
    %43 = vector.extract_strided_slice %5 {offsets = [0, 18, 0], sizes = [2, 4, 32], strides = [1, 1, 1]} : vector<2x64x32xf32> to vector<2x4x32xf32>
    %44 = vector.extract_strided_slice %5 {offsets = [0, 26, 0], sizes = [2, 4, 32], strides = [1, 1, 1]} : vector<2x64x32xf32> to vector<2x4x32xf32>
    %45 = vector.extract_strided_slice %5 {offsets = [0, 34, 0], sizes = [2, 4, 32], strides = [1, 1, 1]} : vector<2x64x32xf32> to vector<2x4x32xf32>
    %46 = vector.extract_strided_slice %5 {offsets = [0, 42, 0], sizes = [2, 4, 32], strides = [1, 1, 1]} : vector<2x64x32xf32> to vector<2x4x32xf32>
    %47 = tpu.concatenate %43, %44, %45, %46 in 1 : vector<2x4x32xf32>, vector<2x4x32xf32>, vector<2x4x32xf32>, vector<2x4x32xf32> -> vector<2x16x32xf32>
    %48 = vector.shape_cast %47 : vector<2x16x32xf32> to vector<2x512xf32>
    %cst_14 = arith.constant dense<0.000000e+00> : vector<2x64xf32>
    %49 = tpu.matmul %48, %6, %cst_14 {dimension_numbers = #tpu.dot_dimension_numbers<[1], [0], [0], [1], [0, 0, 1, 1], [], []>} : vector<2x512xf32>, vector<512x64xf32>, vector<2x64xf32> -> vector<2x64xf32>
    %cst_15 = arith.constant 0.000000e+00 : f32
    %50 = vector.broadcast %cst_15 : f32 to vector<2x64xf32>
    %51 = arith.maximumf %49, %50 : vector<2x64xf32>
    %52 = vector.extract_strided_slice %5 {offsets = [0, 20, 0], sizes = [2, 4, 32], strides = [1, 1, 1]} : vector<2x64x32xf32> to vector<2x4x32xf32>
    %53 = vector.extract_strided_slice %5 {offsets = [0, 28, 0], sizes = [2, 4, 32], strides = [1, 1, 1]} : vector<2x64x32xf32> to vector<2x4x32xf32>
    %54 = vector.extract_strided_slice %5 {offsets = [0, 36, 0], sizes = [2, 4, 32], strides = [1, 1, 1]} : vector<2x64x32xf32> to vector<2x4x32xf32>
    %55 = vector.extract_strided_slice %5 {offsets = [0, 44, 0], sizes = [2, 4, 32], strides = [1, 1, 1]} : vector<2x64x32xf32> to vector<2x4x32xf32>
    %56 = tpu.concatenate %52, %53, %54, %55 in 1 : vector<2x4x32xf32>, vector<2x4x32xf32>, vector<2x4x32xf32>, vector<2x4x32xf32> -> vector<2x16x32xf32>
    %57 = vector.shape_cast %56 : vector<2x16x32xf32> to vector<2x512xf32>
    %cst_16 = arith.constant dense<0.000000e+00> : vector<2x64xf32>
    %58 = tpu.matmul %57, %6, %cst_16 {dimension_numbers = #tpu.dot_dimension_numbers<[1], [0], [0], [1], [0, 0, 1, 1], [], []>} : vector<2x512xf32>, vector<512x64xf32>, vector<2x64xf32> -> vector<2x64xf32>
    %cst_17 = arith.constant 0.000000e+00 : f32
    %59 = vector.broadcast %cst_17 : f32 to vector<2x64xf32>
    %60 = arith.maximumf %58, %59 : vector<2x64xf32>
    %61 = vector.extract_strided_slice %5 {offsets = [0, 32, 0], sizes = [2, 4, 32], strides = [1, 1, 1]} : vector<2x64x32xf32> to vector<2x4x32xf32>
    %62 = vector.extract_strided_slice %5 {offsets = [0, 40, 0], sizes = [2, 4, 32], strides = [1, 1, 1]} : vector<2x64x32xf32> to vector<2x4x32xf32>
    %63 = vector.extract_strided_slice %5 {offsets = [0, 48, 0], sizes = [2, 4, 32], strides = [1, 1, 1]} : vector<2x64x32xf32> to vector<2x4x32xf32>
    %64 = vector.extract_strided_slice %5 {offsets = [0, 56, 0], sizes = [2, 4, 32], strides = [1, 1, 1]} : vector<2x64x32xf32> to vector<2x4x32xf32>
    %65 = tpu.concatenate %61, %62, %63, %64 in 1 : vector<2x4x32xf32>, vector<2x4x32xf32>, vector<2x4x32xf32>, vector<2x4x32xf32> -> vector<2x16x32xf32>
    %66 = vector.shape_cast %65 : vector<2x16x32xf32> to vector<2x512xf32>
    %cst_18 = arith.constant dense<0.000000e+00> : vector<2x64xf32>
    %67 = tpu.matmul %66, %6, %cst_18 {dimension_numbers = #tpu.dot_dimension_numbers<[1], [0], [0], [1], [0, 0, 1, 1], [], []>} : vector<2x512xf32>, vector<512x64xf32>, vector<2x64xf32> -> vector<2x64xf32>
    %cst_19 = arith.constant 0.000000e+00 : f32
    %68 = vector.broadcast %cst_19 : f32 to vector<2x64xf32>
    %69 = arith.maximumf %67, %68 : vector<2x64xf32>
    %70 = vector.extract_strided_slice %5 {offsets = [0, 34, 0], sizes = [2, 4, 32], strides = [1, 1, 1]} : vector<2x64x32xf32> to vector<2x4x32xf32>
    %71 = vector.extract_strided_slice %5 {offsets = [0, 42, 0], sizes = [2, 4, 32], strides = [1, 1, 1]} : vector<2x64x32xf32> to vector<2x4x32xf32>
    %72 = vector.extract_strided_slice %5 {offsets = [0, 50, 0], sizes = [2, 4, 32], strides = [1, 1, 1]} : vector<2x64x32xf32> to vector<2x4x32xf32>
    %73 = vector.extract_strided_slice %5 {offsets = [0, 58, 0], sizes = [2, 4, 32], strides = [1, 1, 1]} : vector<2x64x32xf32> to vector<2x4x32xf32>
    %74 = tpu.concatenate %70, %71, %72, %73 in 1 : vector<2x4x32xf32>, vector<2x4x32xf32>, vector<2x4x32xf32>, vector<2x4x32xf32> -> vector<2x16x32xf32>
    %75 = vector.shape_cast %74 : vector<2x16x32xf32> to vector<2x512xf32>
    %cst_20 = arith.constant dense<0.000000e+00> : vector<2x64xf32>
    %76 = tpu.matmul %75, %6, %cst_20 {dimension_numbers = #tpu.dot_dimension_numbers<[1], [0], [0], [1], [0, 0, 1, 1], [], []>} : vector<2x512xf32>, vector<512x64xf32>, vector<2x64xf32> -> vector<2x64xf32>
    %cst_21 = arith.constant 0.000000e+00 : f32
    %77 = vector.broadcast %cst_21 : f32 to vector<2x64xf32>
    %78 = arith.maximumf %76, %77 : vector<2x64xf32>
    %79 = vector.extract_strided_slice %5 {offsets = [0, 36, 0], sizes = [2, 4, 32], strides = [1, 1, 1]} : vector<2x64x32xf32> to vector<2x4x32xf32>
    %80 = vector.extract_strided_slice %5 {offsets = [0, 44, 0], sizes = [2, 4, 32], strides = [1, 1, 1]} : vector<2x64x32xf32> to vector<2x4x32xf32>
    %81 = vector.extract_strided_slice %5 {offsets = [0, 52, 0], sizes = [2, 4, 32], strides = [1, 1, 1]} : vector<2x64x32xf32> to vector<2x4x32xf32>
    %82 = vector.extract_strided_slice %5 {offsets = [0, 60, 0], sizes = [2, 4, 32], strides = [1, 1, 1]} : vector<2x64x32xf32> to vector<2x4x32xf32>
    %83 = tpu.concatenate %79, %80, %81, %82 in 1 : vector<2x4x32xf32>, vector<2x4x32xf32>, vector<2x4x32xf32>, vector<2x4x32xf32> -> vector<2x16x32xf32>
    %84 = vector.shape_cast %83 : vector<2x16x32xf32> to vector<2x512xf32>
    %cst_22 = arith.constant dense<0.000000e+00> : vector<2x64xf32>
    %85 = tpu.matmul %84, %6, %cst_22 {dimension_numbers = #tpu.dot_dimension_numbers<[1], [0], [0], [1], [0, 0, 1, 1], [], []>} : vector<2x512xf32>, vector<512x64xf32>, vector<2x64xf32> -> vector<2x64xf32>
    %cst_23 = arith.constant 0.000000e+00 : f32
    %86 = vector.broadcast %cst_23 : f32 to vector<2x64xf32>
    %87 = arith.maximumf %85, %86 : vector<2x64xf32>
    %88 = tpu.concatenate %15, %24, %33, %42, %51, %60, %69, %78, %87 in 1 : vector<2x64xf32>, vector<2x64xf32>, vector<2x64xf32>, vector<2x64xf32>, vector<2x64xf32>, vector<2x64xf32>, vector<2x64xf32>, vector<2x64xf32>, vector<2x64xf32> -> vector<2x576xf32>
    %c0_24 = arith.constant 0 : index
    %c0_25 = arith.constant 0 : index
    %89 = vector.load %arg3[%c0_24, %c0_25] : memref<576x64xf32, #tpu.memory_space<vmem>>, vector<576x64xf32>
    %cst_26 = arith.constant dense<0.000000e+00> : vector<2x64xf32>
    %90 = tpu.matmul %88, %89, %cst_26 {dimension_numbers = #tpu.dot_dimension_numbers<[1], [0], [0], [1], [0, 0, 1, 1], [], []>} : vector<2x576xf32>, vector<576x64xf32>, vector<2x64xf32> -> vector<2x64xf32>
    %cst_27 = arith.constant 0.000000e+00 : f32
    %91 = vector.broadcast %cst_27 : f32 to vector<2x64xf32>
    %92 = arith.maximumf %90, %91 : vector<2x64xf32>
    %c0_28 = arith.constant 0 : index
    %c0_29 = arith.constant 0 : index
    %93 = vector.load %arg4[%c0_28, %c0_29] : memref<64x1024xf32, #tpu.memory_space<vmem>>, vector<64x1024xf32>
    %cst_30 = arith.constant dense<0.000000e+00> : vector<2x1024xf32>
    %94 = tpu.matmul %92, %93, %cst_30 {dimension_numbers = #tpu.dot_dimension_numbers<[1], [0], [0], [1], [0, 0, 1, 1], [], []>} : vector<2x64xf32>, vector<64x1024xf32>, vector<2x1024xf32> -> vector<2x1024xf32>
    %c0_31 = arith.constant 0 : index
    %c0_32 = arith.constant 0 : index
    %95 = vector.load %arg5[%c0_31, %c0_32] : memref<1x1024xf32, #tpu.memory_space<vmem>>, vector<1x1024xf32>
    %96 = vector.broadcast %95 : vector<1x1024xf32> to vector<2x1024xf32>
    %97 = arith.addf %94, %96 : vector<2x1024xf32>
    %cst_33 = arith.constant 0.000000e+00 : f32
    %98 = vector.broadcast %cst_33 : f32 to vector<2x1024xf32>
    %99 = arith.maximumf %97, %98 : vector<2x1024xf32>
    %c0_34 = arith.constant 0 : index
    %c0_35 = arith.constant 0 : index
    %100 = vector.load %arg6[%c0_34, %c0_35] : memref<1024x7xf32, #tpu.memory_space<vmem>>, vector<1024x7xf32>
    %cst_36 = arith.constant dense<0.000000e+00> : vector<2x7xf32>
    %101 = tpu.matmul %99, %100, %cst_36 {dimension_numbers = #tpu.dot_dimension_numbers<[1], [0], [0], [1], [0, 0, 1, 1], [], []>} : vector<2x1024xf32>, vector<1024x7xf32>, vector<2x7xf32> -> vector<2x7xf32>
    %c0_37 = arith.constant 0 : index
    %c0_38 = arith.constant 0 : index
    %102 = vector.load %arg7[%c0_37, %c0_38] : memref<1x7xf32, #tpu.memory_space<vmem>>, vector<1x7xf32>
    %103 = vector.broadcast %102 : vector<1x7xf32> to vector<2x7xf32>
    %104 = arith.addf %101, %103 : vector<2x7xf32>
    %105 = vector.extract_strided_slice %104 {offsets = [0, 0], sizes = [2, 1], strides = [1, 1]} : vector<2x7xf32> to vector<2x1xf32>
    %106 = vector.extract_strided_slice %104 {offsets = [0, 1], sizes = [2, 6], strides = [1, 1]} : vector<2x7xf32> to vector<2x6xf32>
    %107 = vector.shape_cast %106 : vector<2x6xf32> to vector<1x2x6xf32>
    %cst_39 = arith.constant dense<0.000000e+00> : vector<1xf32>
    %108 = vector.multi_reduction <add>, %107, %cst_39 [1, 2] : vector<1x2x6xf32> to vector<1xf32>
    %109 = vector.shape_cast %108 : vector<1xf32> to vector<1x1x1xf32>
    %110 = vector.extract %109[0, 0, 0] : f32 from vector<1x1x1xf32>
    %111 = vector.broadcast %110 : f32 to vector<1x1xf32>
    %cst_40 = arith.constant 1.200000e+01 : f32
    %112 = vector.broadcast %cst_40 : f32 to vector<1x1xf32>
    %113 = arith.divf %111, %112 : vector<1x1xf32>
    %114 = vector.broadcast %113 : vector<1x1xf32> to vector<2x6xf32>
    %115 = arith.subf %106, %114 : vector<2x6xf32>
    %116 = vector.broadcast %105 : vector<2x1xf32> to vector<2x6xf32>
    %117 = arith.addf %116, %115 : vector<2x6xf32>
    %c0_41 = arith.constant 0 : index
    %c0_42 = arith.constant 0 : index
    %118 = vector.load %arg8[%c0_41, %c0_42] : memref<2x6xf32, #tpu.memory_space<vmem>>, vector<2x6xf32>
    tpu.vector_store %arg8[%c0_41, %c0_42], %117 {strides = array<i32>} : memref<2x6xf32, #tpu.memory_space<vmem>>, vector<2x6xf32>,
    return
  }
}

</mosaic_0001>

<llo_original>
// kernel: conv_dueling_forward.1
$region0: #{conv_dueling_forward.1}
  #allocation0 [shape = 'u32[]', space=smem, size = 0x4, offset = 0x4, fixed_abs, tag = 'smem constant byte address 0x4 - core index']
  #allocation1 [shape = 'u32[72,128]{1,0:T(1,128)}', space=vmem, size = 0x9000, scoped, tag = 'internal scratch']
  %s0 = inlined_call_operand.vmem [shape: f32[128,256], index: 0, kind: input, shape index: {}]
  %s1 = inlined_call_operand.vmem [shape: f32[256,32], index: 1, kind: input, shape index: {}]
  %s2 = inlined_call_operand.vmem [shape: f32[512,64], index: 2, kind: input, shape index: {}]
  %s3 = inlined_call_operand.vmem [shape: f32[576,64], index: 3, kind: input, shape index: {}]
  %s4 = inlined_call_operand.vmem [shape: f32[64,1024], index: 4, kind: input, shape index: {}]
  %s5 = inlined_call_operand.vmem [shape: f32[1,1024], index: 5, kind: input, shape index: {}]
  %s6 = inlined_call_operand.vmem [shape: f32[1024,7], index: 6, kind: input, shape index: {}]
  %s7 = inlined_call_operand.vmem [shape: f32[1,7], index: 7, kind: input, shape index: {}]
  %s8 = inlined_call_operand.hbm [shape: f32[2,6], index: 8, kind: output, shape index: {}]
  %s9 = sld [smem:[#allocation0]]
  $region42: #{conv_dueling_forward.1} parent=0
    _
  %s11 = ssub.s32 1, %s9
  %s12 = scalar_select 0, %s11, %s9
  $region1: #{conv_dueling_forward.1} parent=0
    #allocation2 [shape = 'u8[1024]{0}', space=vmem, size = 0x400, scoped, tag = 'output window, operand 0, single buffered']
    #allocation3 [shape = 's32[1]{0}', space=sflag, size = 0x4, scoped, tag = 'scoped memory for conv_dueling_forward.1']
    %13 = vsyncpa [#allocation3], 0
    // Predicated region
    $region2: #{conv_dueling_forward.1} parent=1 // pred_check
      _
    $region3: #{conv_dueling_forward.1} parent=1 // pred_check_branch
      %15 = sbr.rel (0) target = $region5
    $region4: #{conv_dueling_forward.1} parent=1 // pred_region
      _
    $region5: #{conv_dueling_forward.1} parent=1 // pred_fallthru
      _
    // Predicated region
    $region6: #{conv_dueling_forward.1} parent=1 // pred_check
      _
    $region7: #{conv_dueling_forward.1} parent=1 // pred_check_branch
      %17 = sbr.rel (0) target = $region9
    $region8: #{conv_dueling_forward.1} parent=1 // pred_region
      _
    $region9: #{conv_dueling_forward.1} parent=1 // pred_fallthru
      _
    // Predicated region
    $region10: #{conv_dueling_forward.1} parent=1 // pred_check
      _
    $region11: #{conv_dueling_forward.1} parent=1 // pred_check_branch
      %19 = sbr.rel (0) target = $region13
    $region12: #{conv_dueling_forward.1} parent=1 // pred_region
      _
    $region13: #{conv_dueling_forward.1} parent=1 // pred_fallthru
      _
    // Predicated region
    $region14: #{conv_dueling_forward.1} parent=1 // pred_check
      _
    $region15: #{conv_dueling_forward.1} parent=1 // pred_check_branch
      %21 = sbr.rel (0) target = $region17
    $region16: #{conv_dueling_forward.1} parent=1 // pred_region
      _
    $region17: #{conv_dueling_forward.1} parent=1 // pred_fallthru
      _
    // Predicated region
    $region18: #{conv_dueling_forward.1} parent=1 // pred_check
      _
    $region19: #{conv_dueling_forward.1} parent=1 // pred_check_branch
      %23 = sbr.rel (0) target = $region21
    $region20: #{conv_dueling_forward.1} parent=1 // pred_region
      _
    $region21: #{conv_dueling_forward.1} parent=1 // pred_fallthru
      _
    // Predicated region
    $region22: #{conv_dueling_forward.1} parent=1 // pred_check
      _
    $region23: #{conv_dueling_forward.1} parent=1 // pred_check_branch
      %25 = sbr.rel (0) target = $region25
    $region24: #{conv_dueling_forward.1} parent=1 // pred_region
      _
    $region25: #{conv_dueling_forward.1} parent=1 // pred_fallthru
      _
    // Predicated region
    $region26: #{conv_dueling_forward.1} parent=1 // pred_check
      _
    $region27: #{conv_dueling_forward.1} parent=1 // pred_check_branch
      %27 = sbr.rel (0) target = $region29
    $region28: #{conv_dueling_forward.1} parent=1 // pred_region
      _
    $region29: #{conv_dueling_forward.1} parent=1 // pred_fallthru
      _
    // Predicated region
    $region30: #{conv_dueling_forward.1} parent=1 // pred_check
      _
    $region31: #{conv_dueling_forward.1} parent=1 // pred_check_branch
      %29 = sbr.rel (0) target = $region33
    $region32: #{conv_dueling_forward.1} parent=1 // pred_region
      _
    $region33: #{conv_dueling_forward.1} parent=1 // pred_fallthru
      _
    %v30 = vld [vmem:[%s0] sm:$0xff]
    %v31 = vld [vmem:[%s0 + $0x8] sm:$0xff]
    %v32 = vld [vmem:[%s0 + $0x10] sm:$0xff]
    %v33 = vld [vmem:[%s0 + $0x18] sm:$0xff]
    %v34 = vld [vmem:[%s0 + $0x20] sm:$0xff]
    %v35 = vld [vmem:[%s0 + $0x28] sm:$0xff]
    %v36 = vld [vmem:[%s0 + $0x30] sm:$0xff]
    %v37 = vld [vmem:[%s0 + $0x38] sm:$0xff]
    %v38 = vld [vmem:[%s0 + $0x40] sm:$0xff]
    %v39 = vld [vmem:[%s0 + $0x48] sm:$0xff]
    %v40 = vld [vmem:[%s0 + $0x50] sm:$0xff]
    %v41 = vld [vmem:[%s0 + $0x58] sm:$0xff]
    %v42 = vld [vmem:[%s0 + $0x60] sm:$0xff]
    %v43 = vld [vmem:[%s0 + $0x68] sm:$0xff]
    %v44 = vld [vmem:[%s0 + $0x70] sm:$0xff]
    %v45 = vld [vmem:[%s0 + $0x78] sm:$0xff]
    %v46 = vld [vmem:[%s0 + $0x80] sm:$0xff]
    %v47 = vld [vmem:[%s0 + $0x88] sm:$0xff]
    %v48 = vld [vmem:[%s0 + $0x90] sm:$0xff]
    %v49 = vld [vmem:[%s0 + $0x98] sm:$0xff]
    %v50 = vld [vmem:[%s0 + $0xa0] sm:$0xff]
    %v51 = vld [vmem:[%s0 + $0xa8] sm:$0xff]
    %v52 = vld [vmem:[%s0 + $0xb0] sm:$0xff]
    %v53 = vld [vmem:[%s0 + $0xb8] sm:$0xff]
    %v54 = vld [vmem:[%s0 + $0xc0] sm:$0xff]
    %v55 = vld [vmem:[%s0 + $0xc8] sm:$0xff]
    %v56 = vld [vmem:[%s0 + $0xd0] sm:$0xff]
    %v57 = vld [vmem:[%s0 + $0xd8] sm:$0xff]
    %v58 = vld [vmem:[%s0 + $0xe0] sm:$0xff]
    %v59 = vld [vmem:[%s0 + $0xe8] sm:$0xff]
    %v60 = vld [vmem:[%s0 + $0xf0] sm:$0xff]
    %v61 = vld [vmem:[%s0 + $0xf8] sm:$0xff]
    %v62 = vld [vmem:[%s1] sm:$0xff]
    %v63 = vld [vmem:[%s1 + $0x8] sm:$0xff]
    %v64 = vld [vmem:[%s1 + $0x10] sm:$0xff]
    %v65 = vld [vmem:[%s1 + $0x18] sm:$0xff]
    %v66 = vld [vmem:[%s1 + $0x20] sm:$0xff]
    %v67 = vld [vmem:[%s1 + $0x28] sm:$0xff]
    %v68 = vld [vmem:[%s1 + $0x30] sm:$0xff]
    %v69 = vld [vmem:[%s1 + $0x38] sm:$0xff]
    %v70 = vld [vmem:[%s1 + $0x40] sm:$0xff]
    %v71 = vld [vmem:[%s1 + $0x48] sm:$0xff]
    %v72 = vld [vmem:[%s1 + $0x50] sm:$0xff]
    %v73 = vld [vmem:[%s1 + $0x58] sm:$0xff]
    %v74 = vld [vmem:[%s1 + $0x60] sm:$0xff]
    %v75 = vld [vmem:[%s1 + $0x68] sm:$0xff]
    %v76 = vld [vmem:[%s1 + $0x70] sm:$0xff]
    %v77 = vld [vmem:[%s1 + $0x78] sm:$0xff]
    %v78 = vld [vmem:[%s1 + $0x80] sm:$0xff]
    %v79 = vld [vmem:[%s1 + $0x88] sm:$0xff]
    %v80 = vld [vmem:[%s1 + $0x90] sm:$0xff]
    %v81 = vld [vmem:[%s1 + $0x98] sm:$0xff]
    %v82 = vld [vmem:[%s1 + $0xa0] sm:$0xff]
    %v83 = vld [vmem:[%s1 + $0xa8] sm:$0xff]
    %v84 = vld [vmem:[%s1 + $0xb0] sm:$0xff]
    %v85 = vld [vmem:[%s1 + $0xb8] sm:$0xff]
    %v86 = vld [vmem:[%s1 + $0xc0] sm:$0xff]
    %v87 = vld [vmem:[%s1 + $0xc8] sm:$0xff]
    %v88 = vld [vmem:[%s1 + $0xd0] sm:$0xff]
    %v89 = vld [vmem:[%s1 + $0xd8] sm:$0xff]
    %v90 = vld [vmem:[%s1 + $0xe0] sm:$0xff]
    %v91 = vld [vmem:[%s1 + $0xe8] sm:$0xff]
    %v92 = vld [vmem:[%s1 + $0xf0] sm:$0xff]
    %v93 = vld [vmem:[%s1 + $0xf8] sm:$0xff]
    %94 = vmatpush.msra.mxu0 %v77
    %95 = vmatpush.msra.mxu0 %v76
    %96 = vmatpush.msra.mxu0 %v75
    %97 = vmatpush.msra.mxu0 %v74
    %98 = vmatpush.msra.mxu0 %v73
    %99 = vmatpush.msra.mxu0 %v72
    %100 = vmatpush.msra.mxu0 %v71
    %101 = vmatpush.msra.mxu0 %v70
    %102 = vmatpush.msra.mxu0 %v69
    %103 = vmatpush.msra.mxu0 %v68
    %104 = vmatpush.msra.mxu0 %v67
    %105 = vmatpush.msra.mxu0 %v66
    %106 = vmatpush.msra.mxu0 %v65
    %107 = vmatpush.msra.mxu0 %v64
    %108 = vmatpush.msra.mxu0 %v63
    %109 = vmatpush.msra.mxu0 %v62
    %110 = vmatmul.f32.gmra.mxu0 %v30
    %v111 = vpop.f32.mrf.mxu0
    %v112 = vadd.f32 0.0, %v111
    %113 = vmatmul.f32.gmra.mxu0 %v32
    %v114 = vpop.f32.mrf.mxu0
    %v115 = vadd.f32 0.0, %v114
    %116 = vmatmul.f32.gmra.mxu0 %v34
    %v117 = vpop.f32.mrf.mxu0
    %v118 = vadd.f32 0.0, %v117
    %119 = vmatmul.f32.gmra.mxu0 %v36
    %v120 = vpop.f32.mrf.mxu0
    %v121 = vadd.f32 0.0, %v120
    %122 = vmatmul.f32.gmra.mxu0 %v38
    %v123 = vpop.f32.mrf.mxu0
    %v124 = vadd.f32 0.0, %v123
    %125 = vmatmul.f32.gmra.mxu0 %v40
    %v126 = vpop.f32.mrf.mxu0
    %v127 = vadd.f32 0.0, %v126
    %128 = vmatmul.f32.gmra.mxu0 %v42
    %v129 = vpop.f32.mrf.mxu0
    %v130 = vadd.f32 0.0, %v129
    %131 = vmatmul.f32.gmra.mxu0 %v44
    %v132 = vpop.f32.mrf.mxu0
    %v133 = vadd.f32 0.0, %v132
    %134 = vmatmul.f32.gmra.mxu0 %v46
    %v135 = vpop.f32.mrf.mxu0
    %v136 = vadd.f32 0.0, %v135
    %137 = vmatmul.f32.gmra.mxu0 %v48
    %v138 = vpop.f32.mrf.mxu0
    %v139 = vadd.f32 0.0, %v138
    %140 = vmatmul.f32.gmra.mxu0 %v50
    %v141 = vpop.f32.mrf.mxu0
    %v142 = vadd.f32 0.0, %v141
    %143 = vmatmul.f32.gmra.mxu0 %v52
    %v144 = vpop.f32.mrf.mxu0
    %v145 = vadd.f32 0.0, %v144
    %146 = vmatmul.f32.gmra.mxu0 %v54
    %v147 = vpop.f32.mrf.mxu0
    %v148 = vadd.f32 0.0, %v147
    %149 = vmatmul.f32.gmra.mxu0 %v56
    %v150 = vpop.f32.mrf.mxu0
    %v151 = vadd.f32 0.0, %v150
    %152 = vmatmul.f32.gmra.mxu0 %v58
    %v153 = vpop.f32.mrf.mxu0
    %v154 = vadd.f32 0.0, %v153
    %155 = vmatmul.f32.gmra.mxu0 %v60
    %v156 = vpop.f32.mrf.mxu0
    %v157 = vadd.f32 0.0, %v156
    %158 = vdwg.mxu0
    %159 = vmatpush.msra.mxu0 %v93
    %160 = vmatpush.msra.mxu0 %v92
    %161 = vmatpush.msra.mxu0 %v91
    %162 = vmatpush.msra.mxu0 %v90
    %163 = vmatpush.msra.mxu0 %v89
    %164 = vmatpush.msra.mxu0 %v88
    %165 = vmatpush.msra.mxu0 %v87
    %166 = vmatpush.msra.mxu0 %v86
    %167 = vmatpush.msra.mxu0 %v85
    %168 = vmatpush.msra.mxu0 %v84
    %169 = vmatpush.msra.mxu0 %v83
    %170 = vmatpush.msra.mxu0 %v82
    %171 = vmatpush.msra.mxu0 %v81
    %172 = vmatpush.msra.mxu0 %v80
    %173 = vmatpush.msra.mxu0 %v79
    %174 = vmatpush.msra.mxu0 %v78
    %175 = vmatmul.f32.gmra.mxu0 %v31
    %v176 = vpop.f32.mrf.mxu0
    %v177 = vadd.f32 %v112, %v176
    %178 = vmatmul.f32.gmra.mxu0 %v33
    %v179 = vpop.f32.mrf.mxu0
    %v180 = vadd.f32 %v115, %v179
    %181 = vmatmul.f32.gmra.mxu0 %v35
    %v182 = vpop.f32.mrf.mxu0
    %v183 = vadd.f32 %v118, %v182
    %184 = vmatmul.f32.gmra.mxu0 %v37
    %v185 = vpop.f32.mrf.mxu0
    %v186 = vadd.f32 %v121, %v185
    %187 = vmatmul.f32.gmra.mxu0 %v39
    %v188 = vpop.f32.mrf.mxu0
    %v189 = vadd.f32 %v124, %v188
    %190 = vmatmul.f32.gmra.mxu0 %v41
    %v191 = vpop.f32.mrf.mxu0
    %v192 = vadd.f32 %v127, %v191
    %193 = vmatmul.f32.gmra.mxu0 %v43
    %v194 = vpop.f32.mrf.mxu0
    %v195 = vadd.f32 %v130, %v194
    %196 = vmatmul.f32.gmra.mxu0 %v45
    %v197 = vpop.f32.mrf.mxu0
    %v198 = vadd.f32 %v133, %v197
    %199 = vmatmul.f32.gmra.mxu0 %v47
    %v200 = vpop.f32.mrf.mxu0
    %v201 = vadd.f32 %v136, %v200
    %202 = vmatmul.f32.gmra.mxu0 %v49
    %v203 = vpop.f32.mrf.mxu0
    %v204 = vadd.f32 %v139, %v203
    %205 = vmatmul.f32.gmra.mxu0 %v51
    %v206 = vpop.f32.mrf.mxu0
    %v207 = vadd.f32 %v142, %v206
    %208 = vmatmul.f32.gmra.mxu0 %v53
    %v209 = vpop.f32.mrf.mxu0
    %v210 = vadd.f32 %v145, %v209
    %211 = vmatmul.f32.gmra.mxu0 %v55
    %v212 = vpop.f32.mrf.mxu0
    %v213 = vadd.f32 %v148, %v212
    %214 = vmatmul.f32.gmra.mxu0 %v57
    %v215 = vpop.f32.mrf.mxu0
    %v216 = vadd.f32 %v151, %v215
    %217 = vmatmul.f32.gmra.mxu0 %v59
    %v218 = vpop.f32.mrf.mxu0
    %v219 = vadd.f32 %v154, %v218
    %220 = vmatmul.f32.gmra.mxu0 %v61
    %v221 = vpop.f32.mrf.mxu0
    %v222 = vadd.f32 %v157, %v221
    %223 = vdwg.mxu0
    %v224 = vmax.f32 %v177, 0.0
    %v225 = vmax.f32 %v180, 0.0
    %v226 = vmax.f32 %v183, 0.0
    %v227 = vmax.f32 %v186, 0.0
    %v228 = vmax.f32 %v189, 0.0
    %v229 = vmax.f32 %v192, 0.0
    %v230 = vmax.f32 %v195, 0.0
    %v231 = vmax.f32 %v198, 0.0
    %v232 = vmax.f32 %v201, 0.0
    %v233 = vmax.f32 %v204, 0.0
    %v234 = vmax.f32 %v207, 0.0
    %v235 = vmax.f32 %v210, 0.0
    %v236 = vmax.f32 %v213, 0.0
    %v237 = vmax.f32 %v216, 0.0
    %v238 = vmax.f32 %v219, 0.0
    %v239 = vmax.f32 %v222, 0.0
    %v240 = vld [vmem:[%s2] sm:$0xff]
    %v241 = vld [vmem:[%s2 + $0x8] sm:$0xff]
    %v242 = vld [vmem:[%s2 + $0x10] sm:$0xff]
    %v243 = vld [vmem:[%s2 + $0x18] sm:$0xff]
    %v244 = vld [vmem:[%s2 + $0x20] sm:$0xff]
    %v245 = vld [vmem:[%s2 + $0x28] sm:$0xff]
    %v246 = vld [vmem:[%s2 + $0x30] sm:$0xff]
    %v247 = vld [vmem:[%s2 + $0x38] sm:$0xff]
    %v248 = vld [vmem:[%s2 + $0x40] sm:$0xff]
    %v249 = vld [vmem:[%s2 + $0x48] sm:$0xff]
    %v250 = vld [vmem:[%s2 + $0x50] sm:$0xff]
    %v251 = vld [vmem:[%s2 + $0x58] sm:$0xff]
    %v252 = vld [vmem:[%s2 + $0x60] sm:$0xff]
    %v253 = vld [vmem:[%s2 + $0x68] sm:$0xff]
    %v254 = vld [vmem:[%s2 + $0x70] sm:$0xff]
    %v255 = vld [vmem:[%s2 + $0x78] sm:$0xff]
    %v256 = vld [vmem:[%s2 + $0x80] sm:$0xff]
    %v257 = vld [vmem:[%s2 + $0x88] sm:$0xff]
    %v258 = vld [vmem:[%s2 + $0x90] sm:$0xff]
    %v259 = vld [vmem:[%s2 + $0x98] sm:$0xff]
    %v260 = vld [vmem:[%s2 + $0xa0] sm:$0xff]
    %v261 = vld [vmem:[%s2 + $0xa8] sm:$0xff]
    %v262 = vld [vmem:[%s2 + $0xb0] sm:$0xff]
    %v263 = vld [vmem:[%s2 + $0xb8] sm:$0xff]
    %v264 = vld [vmem:[%s2 + $0xc0] sm:$0xff]
    %v265 = vld [vmem:[%s2 + $0xc8] sm:$0xff]
    %v266 = vld [vmem:[%s2 + $0xd0] sm:$0xff]
    %v267 = vld [vmem:[%s2 + $0xd8] sm:$0xff]
    %v268 = vld [vmem:[%s2 + $0xe0] sm:$0xff]
    %v269 = vld [vmem:[%s2 + $0xe8] sm:$0xff]
    %v270 = vld [vmem:[%s2 + $0xf0] sm:$0xff]
    %v271 = vld [vmem:[%s2 + $0xf8] sm:$0xff]
    %v272 = vld [vmem:[%s2 + $0x100] sm:$0xff]
    %v273 = vld [vmem:[%s2 + $0x108] sm:$0xff]
    %v274 = vld [vmem:[%s2 + $0x110] sm:$0xff]
    %v275 = vld [vmem:[%s2 + $0x118] sm:$0xff]
    %v276 = vld [vmem:[%s2 + $0x120] sm:$0xff]
    %v277 = vld [vmem:[%s2 + $0x128] sm:$0xff]
    %v278 = vld [vmem:[%s2 + $0x130] sm:$0xff]
    %v279 = vld [vmem:[%s2 + $0x138] sm:$0xff]
    %v280 = vld [vmem:[%s2 + $0x140] sm:$0xff]
    %v281 = vld [vmem:[%s2 + $0x148] sm:$0xff]
    %v282 = vld [vmem:[%s2 + $0x150] sm:$0xff]
    %v283 = vld [vmem:[%s2 + $0x158] sm:$0xff]
    %v284 = vld [vmem:[%s2 + $0x160] sm:$0xff]
    %v285 = vld [vmem:[%s2 + $0x168] sm:$0xff]
    %v286 = vld [vmem:[%s2 + $0x170] sm:$0xff]
    %v287 = vld [vmem:[%s2 + $0x178] sm:$0xff]
    %v288 = vld [vmem:[%s2 + $0x180] sm:$0xff]
    %v289 = vld [vmem:[%s2 + $0x188] sm:$0xff]
    %v290 = vld [vmem:[%s2 + $0x190] sm:$0xff]
    %v291 = vld [vmem:[%s2 + $0x198] sm:$0xff]
    %v292 = vld [vmem:[%s2 + $0x1a0] sm:$0xff]
    %v293 = vld [vmem:[%s2 + $0x1a8] sm:$0xff]
    %v294 = vld [vmem:[%s2 + $0x1b0] sm:$0xff]
    %v295 = vld [vmem:[%s2 + $0x1b8] sm:$0xff]
    %v296 = vld [vmem:[%s2 + $0x1c0] sm:$0xff]
    %v297 = vld [vmem:[%s2 + $0x1c8] sm:$0xff]
    %v298 = vld [vmem:[%s2 + $0x1d0] sm:$0xff]
    %v299 = vld [vmem:[%s2 + $0x1d8] sm:$0xff]
    %v300 = vld [vmem:[%s2 + $0x1e0] sm:$0xff]
    %v301 = vld [vmem:[%s2 + $0x1e8] sm:$0xff]
    %v302 = vld [vmem:[%s2 + $0x1f0] sm:$0xff]
    %v303 = vld [vmem:[%s2 + $0x1f8] sm:$0xff]
    %v306 = vrot.slane %v225, 4
    %v307 = vrot.slane %v233, 4
    %v312 = vrot.slane %v227, 4
    %v313 = vrot.slane %v235, 4
    %vm316 = vcmask 1043456
    %v317 = vsel %vm316, %v224, %v306
    %v318 = vsel %vm316, %v232, %v307
    %v319 = vsel %vm316, %v226, %v312
    %v320 = vsel %vm316, %v234, %v313
    %v321 = vrot.slane %v317, 4
    %vm322 = vcmask 1047556
    %v323 = vsel %vm322, 0.0, %v321
    %v325 = vunpack.c.l.s4 1983009808
    %v326 = vunpack.c.0.s8 %v325
    %v327 = vperm.slane %v317, %v326
    %v329 = vunpack.c.l.s4 1983009808
    %v330 = vunpack.c.0.s8 %v329
    %v331 = vperm.slane %v323, %v330
    %v332 = vrot.slane %v318, 4
    %v333 = vsel %vm322, 0.0, %v332
    %v335 = vunpack.c.l.s4 1983009808
    %v336 = vunpack.c.0.s8 %v335
    %v337 = vperm.slane %v318, %v336
    %v339 = vunpack.c.l.s4 1983009808
    %v340 = vunpack.c.0.s8 %v339
    %v341 = vperm.slane %v333, %v340
    %v342 = vrot.slane %v337, 4
    %v343 = vsel %vm322, %v342, %v327
    %v344 = vrot.slane %v327, 4
    %v345 = vsel %vm322, %v337, %v344
    %v347 = vunpack.c.l.s4 1934713408
    %v348 = vunpack.c.0.s8 %v347
    %v349 = vperm.slane %v343, %v348
    %v351 = vunpack.c.l.s4 1934713408
    %v352 = vunpack.c.0.s8 %v351
    %v353 = vperm.slane %v345, %v352
    %v354 = vrot.slane %v341, 4
    %v355 = vsel %vm322, %v354, %v331
    %v356 = vrot.slane %v331, 4
    %v357 = vsel %vm322, %v341, %v356
    %v359 = vunpack.c.l.s4 1934713408
    %v360 = vunpack.c.0.s8 %v359
    %v361 = vperm.slane %v355, %v360
    %v363 = vunpack.c.l.s4 1934713408
    %v364 = vunpack.c.0.s8 %v363
    %v365 = vperm.slane %v357, %v364
    %v366 = vrot.slane %v349, 4
    %v367 = vsel %vm322, 0.0, %v366
    %v368 = vrot.slane %v353, 4
    %v369 = vsel %vm322, 0.0, %v368
    %v370 = vrot.slane %v361, 4
    %v371 = vsel %vm322, 0.0, %v370
    %v372 = vrot.slane %v365, 4
    %v373 = vsel %vm322, 0.0, %v372
    %v374 = vrot.slane %v319, 4
    %v375 = vsel %vm322, 0.0, %v374
    %v377 = vunpack.c.l.s4 1983009808
    %v378 = vunpack.c.0.s8 %v377
    %v379 = vperm.slane %v319, %v378
    %v381 = vunpack.c.l.s4 1983009808
    %v382 = vunpack.c.0.s8 %v381
    %v383 = vperm.slane %v375, %v382
    %v384 = vrot.slane %v320, 4
    %v385 = vsel %vm322, 0.0, %v384
    %v387 = vunpack.c.l.s4 1983009808
    %v388 = vunpack.c.0.s8 %v387
    %v389 = vperm.slane %v320, %v388
    %v391 = vunpack.c.l.s4 1983009808
    %v392 = vunpack.c.0.s8 %v391
    %v393 = vperm.slane %v385, %v392
    %v394 = vrot.slane %v389, 4
    %v395 = vsel %vm322, %v394, %v379
    %v396 = vrot.slane %v379, 4
    %v397 = vsel %vm322, %v389, %v396
    %v399 = vunpack.c.l.s4 1934713408
    %v400 = vunpack.c.0.s8 %v399
    %v401 = vperm.slane %v395, %v400
    %v403 = vunpack.c.l.s4 1934713408
    %v404 = vunpack.c.0.s8 %v403
    %v405 = vperm.slane %v397, %v404
    %v406 = vrot.slane %v393, 4
    %v407 = vsel %vm322, %v406, %v383
    %v408 = vrot.slane %v383, 4
    %v409 = vsel %vm322, %v393, %v408
    %v411 = vunpack.c.l.s4 1934713408
    %v412 = vunpack.c.0.s8 %v411
    %v413 = vperm.slane %v407, %v412
    %v415 = vunpack.c.l.s4 1934713408
    %v416 = vunpack.c.0.s8 %v415
    %v417 = vperm.slane %v409, %v416
    %v418 = vrot.slane %v401, 4
    %v419 = vsel %vm322, 0.0, %v418
    %v420 = vrot.slane %v405, 4
    %v421 = vsel %vm322, 0.0, %v420
    %v422 = vrot.slane %v413, 4
    %v423 = vsel %vm322, 0.0, %v422
    %v424 = vrot.slane %v417, 4
    %v425 = vsel %vm322, 0.0, %v424
    %427 = vrot.lane.b32.xlu0 %v367, 32
    %v428 = vpop.permute.xlu0 %427
    %431 = vrot.lane.b32.xlu0 %v353, 64
    %v432 = vpop.permute.xlu0 %431
    %435 = vrot.lane.b32.xlu0 %v369, 96
    %v436 = vpop.permute.xlu0 %435
    %439 = vrot.lane.b32.xlu0 %v371, 32
    %v440 = vpop.permute.xlu0 %439
    %443 = vrot.lane.b32.xlu0 %v365, 64
    %v444 = vpop.permute.xlu0 %443
    %447 = vrot.lane.b32.xlu0 %v373, 96
    %v448 = vpop.permute.xlu0 %447
    %451 = vrot.lane.b32.xlu0 %v419, 32
    %v452 = vpop.permute.xlu0 %451
    %455 = vrot.lane.b32.xlu0 %v405, 64
    %v456 = vpop.permute.xlu0 %455
    %459 = vrot.lane.b32.xlu0 %v421, 96
    %v460 = vpop.permute.xlu0 %459
    %463 = vrot.lane.b32.xlu0 %v423, 32
    %v464 = vpop.permute.xlu0 %463
    %467 = vrot.lane.b32.xlu0 %v417, 64
    %v468 = vpop.permute.xlu0 %467
    %471 = vrot.lane.b32.xlu0 %v425, 96
    %v472 = vpop.permute.xlu0 %471
    %vm474 = vcmask 261120
    %v475 = vsel %vm474, %v349, %v428
    %vm476 = vcmask 523264
    %v477 = vsel %vm476, %v475, %v432
    %vm478 = vcmask 785408
    %v479 = vsel %vm478, %v477, %v436
    %v480 = vsel %vm474, %v361, %v440
    %v481 = vsel %vm476, %v480, %v444
    %v482 = vsel %vm478, %v481, %v448
    %v483 = vsel %vm474, %v401, %v452
    %v484 = vsel %vm476, %v483, %v456
    %v485 = vsel %vm478, %v484, %v460
    %v486 = vsel %vm474, %v413, %v464
    %v487 = vsel %vm476, %v486, %v468
    %v488 = vsel %vm478, %v487, %v472
    %489 = vmatpush.msra.mxu0 %v255
    %490 = vmatpush.msra.mxu0 %v254
    %491 = vmatpush.msra.mxu0 %v253
    %492 = vmatpush.msra.mxu0 %v252
    %493 = vmatpush.msra.mxu0 %v251
    %494 = vmatpush.msra.mxu0 %v250
    %495 = vmatpush.msra.mxu0 %v249
    %496 = vmatpush.msra.mxu0 %v248
    %497 = vmatpush.msra.mxu0 %v247
    %498 = vmatpush.msra.mxu0 %v246
    %499 = vmatpush.msra.mxu0 %v245
    %500 = vmatpush.msra.mxu0 %v244
    %501 = vmatpush.msra.mxu0 %v243
    %502 = vmatpush.msra.mxu0 %v242
    %503 = vmatpush.msra.mxu0 %v241
    %504 = vmatpush.msra.mxu0 %v240
    %505 = vmatmul.f32.gmra.mxu0 %v479
    %v506 = vpop.f32.mrf.mxu0
    %v507 = vadd.f32 0.0, %v506
    %508 = vdwg.mxu0
    %509 = vmatpush.msra.mxu0 %v271
    %510 = vmatpush.msra.mxu0 %v270
    %511 = vmatpush.msra.mxu0 %v269
    %512 = vmatpush.msra.mxu0 %v268
    %513 = vmatpush.msra.mxu0 %v267
    %514 = vmatpush.msra.mxu0 %v266
    %515 = vmatpush.msra.mxu0 %v265
    %516 = vmatpush.msra.mxu0 %v264
    %517 = vmatpush.msra.mxu0 %v263
    %518 = vmatpush.msra.mxu0 %v262
    %519 = vmatpush.msra.mxu0 %v261
    %520 = vmatpush.msra.mxu0 %v260
    %521 = vmatpush.msra.mxu0 %v259
    %522 = vmatpush.msra.mxu0 %v258
    %523 = vmatpush.msra.mxu0 %v257
    %524 = vmatpush.msra.mxu0 %v256
    %525 = vmatmul.f32.gmra.mxu0 %v482
    %v526 = vpop.f32.mrf.mxu0
    %v527 = vadd.f32 %v507, %v526
    %528 = vdwg.mxu0
    %529 = vmatpush.msra.mxu0 %v287
    %530 = vmatpush.msra.mxu0 %v286
    %531 = vmatpush.msra.mxu0 %v285
    %532 = vmatpush.msra.mxu0 %v284
    %533 = vmatpush.msra.mxu0 %v283
    %534 = vmatpush.msra.mxu0 %v282
    %535 = vmatpush.msra.mxu0 %v281
    %536 = vmatpush.msra.mxu0 %v280
    %537 = vmatpush.msra.mxu0 %v279
    %538 = vmatpush.msra.mxu0 %v278
    %539 = vmatpush.msra.mxu0 %v277
    %540 = vmatpush.msra.mxu0 %v276
    %541 = vmatpush.msra.mxu0 %v275
    %542 = vmatpush.msra.mxu0 %v274
    %543 = vmatpush.msra.mxu0 %v273
    %544 = vmatpush.msra.mxu0 %v272
    %545 = vmatmul.f32.gmra.mxu0 %v485
    %v546 = vpop.f32.mrf.mxu0
    %v547 = vadd.f32 %v527, %v546
    %548 = vdwg.mxu0
    %549 = vmatpush.msra.mxu0 %v303
    %550 = vmatpush.msra.mxu0 %v302
    %551 = vmatpush.msra.mxu0 %v301
    %552 = vmatpush.msra.mxu0 %v300
    %553 = vmatpush.msra.mxu0 %v299
    %554 = vmatpush.msra.mxu0 %v298
    %555 = vmatpush.msra.mxu0 %v297
    %556 = vmatpush.msra.mxu0 %v296
    %557 = vmatpush.msra.mxu0 %v295
    %558 = vmatpush.msra.mxu0 %v294
    %559 = vmatpush.msra.mxu0 %v293
    %560 = vmatpush.msra.mxu0 %v292
    %561 = vmatpush.msra.mxu0 %v291
    %562 = vmatpush.msra.mxu0 %v290
    %563 = vmatpush.msra.mxu0 %v289
    %564 = vmatpush.msra.mxu0 %v288
    %565 = vmatmul.f32.gmra.mxu0 %v488
    %v566 = vpop.f32.mrf.mxu0
    %v567 = vadd.f32 %v547, %v566
    %568 = vdwg.mxu0
    %v569 = vmax.f32 %v567, 0.0
    %v572 = vrot.slane %v224, 2
    %v573 = vrot.slane %v232, 2
    %v576 = vrot.slane %v225, 6
    %v577 = vrot.slane %v233, 6
    %v582 = vrot.slane %v226, 2
    %v583 = vrot.slane %v234, 2
    %v586 = vrot.slane %v227, 6
    %v587 = vrot.slane %v235, 6
    %v590 = vsel %vm316, %v572, %v576
    %v591 = vsel %vm316, %v573, %v577
    %v592 = vsel %vm316, %v582, %v586
    %v593 = vsel %vm316, %v583, %v587
    %v594 = vrot.slane %v590, 4
    %v595 = vsel %vm322, 0.0, %v594
    %v597 = vunpack.c.l.s4 1983009808
    %v598 = vunpack.c.0.s8 %v597
    %v599 = vperm.slane %v590, %v598
    %v601 = vunpack.c.l.s4 1983009808
    %v602 = vunpack.c.0.s8 %v601
    %v603 = vperm.slane %v595, %v602
    %v604 = vrot.slane %v591, 4
    %v605 = vsel %vm322, 0.0, %v604
    %v607 = vunpack.c.l.s4 1983009808
    %v608 = vunpack.c.0.s8 %v607
    %v609 = vperm.slane %v591, %v608
    %v611 = vunpack.c.l.s4 1983009808
    %v612 = vunpack.c.0.s8 %v611
    %v613 = vperm.slane %v605, %v612
    %v614 = vrot.slane %v609, 4
    %v615 = vsel %vm322, %v614, %v599
    %v616 = vrot.slane %v599, 4
    %v617 = vsel %vm322, %v609, %v616
    %v619 = vunpack.c.l.s4 1934713408
    %v620 = vunpack.c.0.s8 %v619
    %v621 = vperm.slane %v615, %v620
    %v623 = vunpack.c.l.s4 1934713408
    %v624 = vunpack.c.0.s8 %v623
    %v625 = vperm.slane %v617, %v624
    %v626 = vrot.slane %v613, 4
    %v627 = vsel %vm322, %v626, %v603
    %v628 = vrot.slane %v603, 4
    %v629 = vsel %vm322, %v613, %v628
    %v631 = vunpack.c.l.s4 1934713408
    %v632 = vunpack.c.0.s8 %v631
    %v633 = vperm.slane %v627, %v632
    %v635 = vunpack.c.l.s4 1934713408
    %v636 = vunpack.c.0.s8 %v635
    %v637 = vperm.slane %v629, %v636
    %v638 = vrot.slane %v621, 4
    %v639 = vsel %vm322, 0.0, %v638
    %v640 = vrot.slane %v625, 4
    %v641 = vsel %vm322, 0.0, %v640
    %v642 = vrot.slane %v633, 4
    %v643 = vsel %vm322, 0.0, %v642
    %v644 = vrot.slane %v637, 4
    %v645 = vsel %vm322, 0.0, %v644
    %v646 = vrot.slane %v592, 4
    %v647 = vsel %vm322, 0.0, %v646
    %v649 = vunpack.c.l.s4 1983009808
    %v650 = vunpack.c.0.s8 %v649
    %v651 = vperm.slane %v592, %v650
    %v653 = vunpack.c.l.s4 1983009808
    %v654 = vunpack.c.0.s8 %v653
    %v655 = vperm.slane %v647, %v654
    %v656 = vrot.slane %v593, 4
    %v657 = vsel %vm322, 0.0, %v656
    %v659 = vunpack.c.l.s4 1983009808
    %v660 = vunpack.c.0.s8 %v659
    %v661 = vperm.slane %v593, %v660
    %v663 = vunpack.c.l.s4 1983009808
    %v664 = vunpack.c.0.s8 %v663
    %v665 = vperm.slane %v657, %v664
    %v666 = vrot.slane %v661, 4
    %v667 = vsel %vm322, %v666, %v651
    %v668 = vrot.slane %v651, 4
    %v669 = vsel %vm322, %v661, %v668
    %v671 = vunpack.c.l.s4 1934713408
    %v672 = vunpack.c.0.s8 %v671
    %v673 = vperm.slane %v667, %v672
    %v675 = vunpack.c.l.s4 1934713408
    %v676 = vunpack.c.0.s8 %v675
    %v677 = vperm.slane %v669, %v676
    %v678 = vrot.slane %v665, 4
    %v679 = vsel %vm322, %v678, %v655
    %v680 = vrot.slane %v655, 4
    %v681 = vsel %vm322, %v665, %v680
    %v683 = vunpack.c.l.s4 1934713408
    %v684 = vunpack.c.0.s8 %v683
    %v685 = vperm.slane %v679, %v684
    %v687 = vunpack.c.l.s4 1934713408
    %v688 = vunpack.c.0.s8 %v687
    %v689 = vperm.slane %v681, %v688
    %v690 = vrot.slane %v673, 4
    %v691 = vsel %vm322, 0.0, %v690
    %v692 = vrot.slane %v677, 4
    %v693 = vsel %vm322, 0.0, %v692
    %v694 = vrot.slane %v685, 4
    %v695 = vsel %vm322, 0.0, %v694
    %v696 = vrot.slane %v689, 4
    %v697 = vsel %vm322, 0.0, %v696
    %699 = vrot.lane.b32.xlu0 %v639, 32
    %v700 = vpop.permute.xlu0 %699
    %703 = vrot.lane.b32.xlu0 %v625, 64
    %v704 = vpop.permute.xlu0 %703
    %707 = vrot.lane.b32.xlu0 %v641, 96
    %v708 = vpop.permute.xlu0 %707
    %711 = vrot.lane.b32.xlu0 %v643, 32
    %v712 = vpop.permute.xlu0 %711
    %715 = vrot.lane.b32.xlu0 %v637, 64
    %v716 = vpop.permute.xlu0 %715
    %719 = vrot.lane.b32.xlu0 %v645, 96
    %v720 = vpop.permute.xlu0 %719
    %723 = vrot.lane.b32.xlu0 %v691, 32
    %v724 = vpop.permute.xlu0 %723
    %727 = vrot.lane.b32.xlu0 %v677, 64
    %v728 = vpop.permute.xlu0 %727
    %731 = vrot.lane.b32.xlu0 %v693, 96
    %v732 = vpop.permute.xlu0 %731
    %735 = vrot.lane.b32.xlu0 %v695, 32
    %v736 = vpop.permute.xlu0 %735
    %739 = vrot.lane.b32.xlu0 %v689, 64
    %v740 = vpop.permute.xlu0 %739
    %743 = vrot.lane.b32.xlu0 %v697, 96
    %v744 = vpop.permute.xlu0 %743
    %v746 = vsel %vm474, %v621, %v700
    %v747 = vsel %vm476, %v746, %v704
    %v748 = vsel %vm478, %v747, %v708
    %v749 = vsel %vm474, %v633, %v712
    %v750 = vsel %vm476, %v749, %v716
    %v751 = vsel %vm478, %v750, %v720
    %v752 = vsel %vm474, %v673, %v724
    %v753 = vsel %vm476, %v752, %v728
    %v754 = vsel %vm478, %v753, %v732
    %v755 = vsel %vm474, %v685, %v736
    %v756 = vsel %vm476, %v755, %v740
    %v757 = vsel %vm478, %v756, %v744
    %758 = vmatpush.msra.mxu0 %v255
    %759 = vmatpush.msra.mxu0 %v254
    %760 = vmatpush.msra.mxu0 %v253
    %761 = vmatpush.msra.mxu0 %v252
    %762 = vmatpush.msra.mxu0 %v251
    %763 = vmatpush.msra.mxu0 %v250
    %764 = vmatpush.msra.mxu0 %v249
    %765 = vmatpush.msra.mxu0 %v248
    %766 = vmatpush.msra.mxu0 %v247
    %767 = vmatpush.msra.mxu0 %v246
    %768 = vmatpush.msra.mxu0 %v245
    %769 = vmatpush.msra.mxu0 %v244
    %770 = vmatpush.msra.mxu0 %v243
    %771 = vmatpush.msra.mxu0 %v242
    %772 = vmatpush.msra.mxu0 %v241
    %773 = vmatpush.msra.mxu0 %v240
    %774 = vmatmul.f32.gmra.mxu0 %v748
    %v775 = vpop.f32.mrf.mxu0
    %v776 = vadd.f32 0.0, %v775
    %777 = vdwg.mxu0
    %778 = vmatpush.msra.mxu0 %v271
    %779 = vmatpush.msra.mxu0 %v270
    %780 = vmatpush.msra.mxu0 %v269
    %781 = vmatpush.msra.mxu0 %v268
    %782 = vmatpush.msra.mxu0 %v267
    %783 = vmatpush.msra.mxu0 %v266
    %784 = vmatpush.msra.mxu0 %v265
    %785 = vmatpush.msra.mxu0 %v264
    %786 = vmatpush.msra.mxu0 %v263
    %787 = vmatpush.msra.mxu0 %v262
    %788 = vmatpush.msra.mxu0 %v261
    %789 = vmatpush.msra.mxu0 %v260
    %790 = vmatpush.msra.mxu0 %v259
    %791 = vmatpush.msra.mxu0 %v258
    %792 = vmatpush.msra.mxu0 %v257
    %793 = vmatpush.msra.mxu0 %v256
    %794 = vmatmul.f32.gmra.mxu0 %v751
    %v795 = vpop.f32.mrf.mxu0
    %v796 = vadd.f32 %v776, %v795
    %797 = vdwg.mxu0
    %798 = vmatpush.msra.mxu0 %v287
    %799 = vmatpush.msra.mxu0 %v286
    %800 = vmatpush.msra.mxu0 %v285
    %801 = vmatpush.msra.mxu0 %v284
    %802 = vmatpush.msra.mxu0 %v283
    %803 = vmatpush.msra.mxu0 %v282
    %804 = vmatpush.msra.mxu0 %v281
    %805 = vmatpush.msra.mxu0 %v280
    %806 = vmatpush.msra.mxu0 %v279
    %807 = vmatpush.msra.mxu0 %v278
    %808 = vmatpush.msra.mxu0 %v277
    %809 = vmatpush.msra.mxu0 %v276
    %810 = vmatpush.msra.mxu0 %v275
    %811 = vmatpush.msra.mxu0 %v274
    %812 = vmatpush.msra.mxu0 %v273
    %813 = vmatpush.msra.mxu0 %v272
    %814 = vmatmul.f32.gmra.mxu0 %v754
    %v815 = vpop.f32.mrf.mxu0
    %v816 = vadd.f32 %v796, %v815
    %817 = vdwg.mxu0
    %818 = vmatpush.msra.mxu0 %v303
    %819 = vmatpush.msra.mxu0 %v302
    %820 = vmatpush.msra.mxu0 %v301
    %821 = vmatpush.msra.mxu0 %v300
    %822 = vmatpush.msra.mxu0 %v299
    %823 = vmatpush.msra.mxu0 %v298
    %824 = vmatpush.msra.mxu0 %v297
    %825 = vmatpush.msra.mxu0 %v296
    %826 = vmatpush.msra.mxu0 %v295
    %827 = vmatpush.msra.mxu0 %v294
    %828 = vmatpush.msra.mxu0 %v293
    %829 = vmatpush.msra.mxu0 %v292
    %830 = vmatpush.msra.mxu0 %v291
    %831 = vmatpush.msra.mxu0 %v290
    %832 = vmatpush.msra.mxu0 %v289
    %833 = vmatpush.msra.mxu0 %v288
    %834 = vmatmul.f32.gmra.mxu0 %v757
    %v835 = vpop.f32.mrf.mxu0
    %v836 = vadd.f32 %v816, %v835
    %837 = vdwg.mxu0
    %v838 = vmax.f32 %v836, 0.0
    %v839 = vrot.slane %v224, 4
    %v840 = vrot.slane %v232, 4
    %v843 = vrot.slane %v226, 4
    %v844 = vrot.slane %v234, 4
    %v847 = vsel %vm316, %v839, %v225
    %v848 = vsel %vm316, %v840, %v233
    %v849 = vsel %vm316, %v843, %v227
    %v850 = vsel %vm316, %v844, %v235
    %v851 = vrot.slane %v847, 4
    %v852 = vsel %vm322, 0.0, %v851
    %v854 = vunpack.c.l.s4 1983009808
    %v855 = vunpack.c.0.s8 %v854
    %v856 = vperm.slane %v847, %v855
    %v858 = vunpack.c.l.s4 1983009808
    %v859 = vunpack.c.0.s8 %v858
    %v860 = vperm.slane %v852, %v859
    %v861 = vrot.slane %v848, 4
    %v862 = vsel %vm322, 0.0, %v861
    %v864 = vunpack.c.l.s4 1983009808
    %v865 = vunpack.c.0.s8 %v864
    %v866 = vperm.slane %v848, %v865
    %v868 = vunpack.c.l.s4 1983009808
    %v869 = vunpack.c.0.s8 %v868
    %v870 = vperm.slane %v862, %v869
    %v871 = vrot.slane %v866, 4
    %v872 = vsel %vm322, %v871, %v856
    %v873 = vrot.slane %v856, 4
    %v874 = vsel %vm322, %v866, %v873
    %v876 = vunpack.c.l.s4 1934713408
    %v877 = vunpack.c.0.s8 %v876
    %v878 = vperm.slane %v872, %v877
    %v880 = vunpack.c.l.s4 1934713408
    %v881 = vunpack.c.0.s8 %v880
    %v882 = vperm.slane %v874, %v881
    %v883 = vrot.slane %v870, 4
    %v884 = vsel %vm322, %v883, %v860
    %v885 = vrot.slane %v860, 4
    %v886 = vsel %vm322, %v870, %v885
    %v888 = vunpack.c.l.s4 1934713408
    %v889 = vunpack.c.0.s8 %v888
    %v890 = vperm.slane %v884, %v889
    %v892 = vunpack.c.l.s4 1934713408
    %v893 = vunpack.c.0.s8 %v892
    %v894 = vperm.slane %v886, %v893
    %v895 = vrot.slane %v878, 4
    %v896 = vsel %vm322, 0.0, %v895
    %v897 = vrot.slane %v882, 4
    %v898 = vsel %vm322, 0.0, %v897
    %v899 = vrot.slane %v890, 4
    %v900 = vsel %vm322, 0.0, %v899
    %v901 = vrot.slane %v894, 4
    %v902 = vsel %vm322, 0.0, %v901
    %v903 = vrot.slane %v849, 4
    %v904 = vsel %vm322, 0.0, %v903
    %v906 = vunpack.c.l.s4 1983009808
    %v907 = vunpack.c.0.s8 %v906
    %v908 = vperm.slane %v849, %v907
    %v910 = vunpack.c.l.s4 1983009808
    %v911 = vunpack.c.0.s8 %v910
    %v912 = vperm.slane %v904, %v911
    %v913 = vrot.slane %v850, 4
    %v914 = vsel %vm322, 0.0, %v913
    %v916 = vunpack.c.l.s4 1983009808
    %v917 = vunpack.c.0.s8 %v916
    %v918 = vperm.slane %v850, %v917
    %v920 = vunpack.c.l.s4 1983009808
    %v921 = vunpack.c.0.s8 %v920
    %v922 = vperm.slane %v914, %v921
    %v923 = vrot.slane %v918, 4
    %v924 = vsel %vm322, %v923, %v908
    %v925 = vrot.slane %v908, 4
    %v926 = vsel %vm322, %v918, %v925
    %v928 = vunpack.c.l.s4 1934713408
    %v929 = vunpack.c.0.s8 %v928
    %v930 = vperm.slane %v924, %v929
    %v932 = vunpack.c.l.s4 1934713408
    %v933 = vunpack.c.0.s8 %v932
    %v934 = vperm.slane %v926, %v933
    %v935 = vrot.slane %v922, 4
    %v936 = vsel %vm322, %v935, %v912
    %v937 = vrot.slane %v912, 4
    %v938 = vsel %vm322, %v922, %v937
    %v940 = vunpack.c.l.s4 1934713408
    %v941 = vunpack.c.0.s8 %v940
    %v942 = vperm.slane %v936, %v941
    %v944 = vunpack.c.l.s4 1934713408
    %v945 = vunpack.c.0.s8 %v944
    %v946 = vperm.slane %v938, %v945
    %v947 = vrot.slane %v930, 4
    %v948 = vsel %vm322, 0.0, %v947
    %v949 = vrot.slane %v934, 4
    %v950 = vsel %vm322, 0.0, %v949
    %v951 = vrot.slane %v942, 4
    %v952 = vsel %vm322, 0.0, %v951
    %v953 = vrot.slane %v946, 4
    %v954 = vsel %vm322, 0.0, %v953
    %956 = vrot.lane.b32.xlu0 %v896, 32
    %v957 = vpop.permute.xlu0 %956
    %960 = vrot.lane.b32.xlu0 %v882, 64
    %v961 = vpop.permute.xlu0 %960
    %964 = vrot.lane.b32.xlu0 %v898, 96
    %v965 = vpop.permute.xlu0 %964
    %968 = vrot.lane.b32.xlu0 %v900, 32
    %v969 = vpop.permute.xlu0 %968
    %972 = vrot.lane.b32.xlu0 %v894, 64
    %v973 = vpop.permute.xlu0 %972
    %976 = vrot.lane.b32.xlu0 %v902, 96
    %v977 = vpop.permute.xlu0 %976
    %980 = vrot.lane.b32.xlu0 %v948, 32
    %v981 = vpop.permute.xlu0 %980
    %984 = vrot.lane.b32.xlu0 %v934, 64
    %v985 = vpop.permute.xlu0 %984
    %988 = vrot.lane.b32.xlu0 %v950, 96
    %v989 = vpop.permute.xlu0 %988
    %992 = vrot.lane.b32.xlu0 %v952, 32
    %v993 = vpop.permute.xlu0 %992
    %996 = vrot.lane.b32.xlu0 %v946, 64
    %v997 = vpop.permute.xlu0 %996
    %1000 = vrot.lane.b32.xlu0 %v954, 96
    %v1001 = vpop.permute.xlu0 %1000
    %v1003 = vsel %vm474, %v878, %v957
    %v1004 = vsel %vm476, %v1003, %v961
    %v1005 = vsel %vm478, %v1004, %v965
    %v1006 = vsel %vm474, %v890, %v969
    %v1007 = vsel %vm476, %v1006, %v973
    %v1008 = vsel %vm478, %v1007, %v977
    %v1009 = vsel %vm474, %v930, %v981
    %v1010 = vsel %vm476, %v1009, %v985
    %v1011 = vsel %vm478, %v1010, %v989
    %v1012 = vsel %vm474, %v942, %v993
    %v1013 = vsel %vm476, %v1012, %v997
    %v1014 = vsel %vm478, %v1013, %v1001
    %1015 = vmatpush.msra.mxu0 %v255
    %1016 = vmatpush.msra.mxu0 %v254
    %1017 = vmatpush.msra.mxu0 %v253
    %1018 = vmatpush.msra.mxu0 %v252
    %1019 = vmatpush.msra.mxu0 %v251
    %1020 = vmatpush.msra.mxu0 %v250
    %1021 = vmatpush.msra.mxu0 %v249
    %1022 = vmatpush.msra.mxu0 %v248
    %1023 = vmatpush.msra.mxu0 %v247
    %1024 = vmatpush.msra.mxu0 %v246
    %1025 = vmatpush.msra.mxu0 %v245
    %1026 = vmatpush.msra.mxu0 %v244
    %1027 = vmatpush.msra.mxu0 %v243
    %1028 = vmatpush.msra.mxu0 %v242
    %1029 = vmatpush.msra.mxu0 %v241
    %1030 = vmatpush.msra.mxu0 %v240
    %1031 = vmatmul.f32.gmra.mxu0 %v1005
    %v1032 = vpop.f32.mrf.mxu0
    %v1033 = vadd.f32 0.0, %v1032
    %1034 = vdwg.mxu0
    %1035 = vmatpush.msra.mxu0 %v271
    %1036 = vmatpush.msra.mxu0 %v270
    %1037 = vmatpush.msra.mxu0 %v269
    %1038 = vmatpush.msra.mxu0 %v268
    %1039 = vmatpush.msra.mxu0 %v267
    %1040 = vmatpush.msra.mxu0 %v266
    %1041 = vmatpush.msra.mxu0 %v265
    %1042 = vmatpush.msra.mxu0 %v264
    %1043 = vmatpush.msra.mxu0 %v263
    %1044 = vmatpush.msra.mxu0 %v262
    %1045 = vmatpush.msra.mxu0 %v261
    %1046 = vmatpush.msra.mxu0 %v260
    %1047 = vmatpush.msra.mxu0 %v259
    %1048 = vmatpush.msra.mxu0 %v258
    %1049 = vmatpush.msra.mxu0 %v257
    %1050 = vmatpush.msra.mxu0 %v256
    %1051 = vmatmul.f32.gmra.mxu0 %v1008
    %v1052 = vpop.f32.mrf.mxu0
    %v1053 = vadd.f32 %v1033, %v1052
    %1054 = vdwg.mxu0
    %1055 = vmatpush.msra.mxu0 %v287
    %1056 = vmatpush.msra.mxu0 %v286
    %1057 = vmatpush.msra.mxu0 %v285
    %1058 = vmatpush.msra.mxu0 %v284
    %1059 = vmatpush.msra.mxu0 %v283
    %1060 = vmatpush.msra.mxu0 %v282
    %1061 = vmatpush.msra.mxu0 %v281
    %1062 = vmatpush.msra.mxu0 %v280
    %1063 = vmatpush.msra.mxu0 %v279
    %1064 = vmatpush.msra.mxu0 %v278
    %1065 = vmatpush.msra.mxu0 %v277
    %1066 = vmatpush.msra.mxu0 %v276
    %1067 = vmatpush.msra.mxu0 %v275
    %1068 = vmatpush.msra.mxu0 %v274
    %1069 = vmatpush.msra.mxu0 %v273
    %1070 = vmatpush.msra.mxu0 %v272
    %1071 = vmatmul.f32.gmra.mxu0 %v1011
    %v1072 = vpop.f32.mrf.mxu0
    %v1073 = vadd.f32 %v1053, %v1072
    %1074 = vdwg.mxu0
    %1075 = vmatpush.msra.mxu0 %v303
    %1076 = vmatpush.msra.mxu0 %v302
    %1077 = vmatpush.msra.mxu0 %v301
    %1078 = vmatpush.msra.mxu0 %v300
    %1079 = vmatpush.msra.mxu0 %v299
    %1080 = vmatpush.msra.mxu0 %v298
    %1081 = vmatpush.msra.mxu0 %v297
    %1082 = vmatpush.msra.mxu0 %v296
    %1083 = vmatpush.msra.mxu0 %v295
    %1084 = vmatpush.msra.mxu0 %v294
    %1085 = vmatpush.msra.mxu0 %v293
    %1086 = vmatpush.msra.mxu0 %v292
    %1087 = vmatpush.msra.mxu0 %v291
    %1088 = vmatpush.msra.mxu0 %v290
    %1089 = vmatpush.msra.mxu0 %v289
    %1090 = vmatpush.msra.mxu0 %v288
    %1091 = vmatmul.f32.gmra.mxu0 %v1014
    %v1092 = vpop.f32.mrf.mxu0
    %v1093 = vadd.f32 %v1073, %v1092
    %1094 = vdwg.mxu0
    %v1095 = vmax.f32 %v1093, 0.0
    %v1098 = vrot.slane %v229, 4
    %v1099 = vrot.slane %v237, 4
    %v1102 = vsel %vm316, %v228, %v1098
    %v1103 = vsel %vm316, %v236, %v1099
    %v1104 = vrot.slane %v1102, 4
    %v1105 = vsel %vm322, 0.0, %v1104
    %v1107 = vunpack.c.l.s4 1983009808
    %v1108 = vunpack.c.0.s8 %v1107
    %v1109 = vperm.slane %v1102, %v1108
    %v1111 = vunpack.c.l.s4 1983009808
    %v1112 = vunpack.c.0.s8 %v1111
    %v1113 = vperm.slane %v1105, %v1112
    %v1114 = vrot.slane %v1103, 4
    %v1115 = vsel %vm322, 0.0, %v1114
    %v1117 = vunpack.c.l.s4 1983009808
    %v1118 = vunpack.c.0.s8 %v1117
    %v1119 = vperm.slane %v1103, %v1118
    %v1121 = vunpack.c.l.s4 1983009808
    %v1122 = vunpack.c.0.s8 %v1121
    %v1123 = vperm.slane %v1115, %v1122
    %v1124 = vrot.slane %v1119, 4
    %v1125 = vsel %vm322, %v1124, %v1109
    %v1126 = vrot.slane %v1109, 4
    %v1127 = vsel %vm322, %v1119, %v1126
    %v1129 = vunpack.c.l.s4 1934713408
    %v1130 = vunpack.c.0.s8 %v1129
    %v1131 = vperm.slane %v1125, %v1130
    %v1133 = vunpack.c.l.s4 1934713408
    %v1134 = vunpack.c.0.s8 %v1133
    %v1135 = vperm.slane %v1127, %v1134
    %v1136 = vrot.slane %v1123, 4
    %v1137 = vsel %vm322, %v1136, %v1113
    %v1138 = vrot.slane %v1113, 4
    %v1139 = vsel %vm322, %v1123, %v1138
    %v1141 = vunpack.c.l.s4 1934713408
    %v1142 = vunpack.c.0.s8 %v1141
    %v1143 = vperm.slane %v1137, %v1142
    %v1145 = vunpack.c.l.s4 1934713408
    %v1146 = vunpack.c.0.s8 %v1145
    %v1147 = vperm.slane %v1139, %v1146
    %v1148 = vrot.slane %v1131, 4
    %v1149 = vsel %vm322, 0.0, %v1148
    %v1150 = vrot.slane %v1135, 4
    %v1151 = vsel %vm322, 0.0, %v1150
    %v1152 = vrot.slane %v1143, 4
    %v1153 = vsel %vm322, 0.0, %v1152
    %v1154 = vrot.slane %v1147, 4
    %v1155 = vsel %vm322, 0.0, %v1154
    %1157 = vrot.lane.b32.xlu0 %v1149, 32
    %v1158 = vpop.permute.xlu0 %1157
    %1161 = vrot.lane.b32.xlu0 %v1135, 64
    %v1162 = vpop.permute.xlu0 %1161
    %1165 = vrot.lane.b32.xlu0 %v1151, 96
    %v1166 = vpop.permute.xlu0 %1165
    %1169 = vrot.lane.b32.xlu0 %v1153, 32
    %v1170 = vpop.permute.xlu0 %1169
    %1173 = vrot.lane.b32.xlu0 %v1147, 64
    %v1174 = vpop.permute.xlu0 %1173
    %1177 = vrot.lane.b32.xlu0 %v1155, 96
    %v1178 = vpop.permute.xlu0 %1177
    %v1180 = vsel %vm474, %v1131, %v1158
    %v1181 = vsel %vm476, %v1180, %v1162
    %v1182 = vsel %vm478, %v1181, %v1166
    %v1183 = vsel %vm474, %v1143, %v1170
    %v1184 = vsel %vm476, %v1183, %v1174
    %v1185 = vsel %vm478, %v1184, %v1178
    %1186 = vmatpush.msra.mxu0 %v255
    %1187 = vmatpush.msra.mxu0 %v254
    %1188 = vmatpush.msra.mxu0 %v253
    %1189 = vmatpush.msra.mxu0 %v252
    %1190 = vmatpush.msra.mxu0 %v251
    %1191 = vmatpush.msra.mxu0 %v250
    %1192 = vmatpush.msra.mxu0 %v249
    %1193 = vmatpush.msra.mxu0 %v248
    %1194 = vmatpush.msra.mxu0 %v247
    %1195 = vmatpush.msra.mxu0 %v246
    %1196 = vmatpush.msra.mxu0 %v245
    %1197 = vmatpush.msra.mxu0 %v244
    %1198 = vmatpush.msra.mxu0 %v243
    %1199 = vmatpush.msra.mxu0 %v242
    %1200 = vmatpush.msra.mxu0 %v241
    %1201 = vmatpush.msra.mxu0 %v240
    %1202 = vmatmul.f32.gmra.mxu0 %v485
    %v1203 = vpop.f32.mrf.mxu0
    %v1204 = vadd.f32 0.0, %v1203
    %1205 = vdwg.mxu0
    %1206 = vmatpush.msra.mxu0 %v271
    %1207 = vmatpush.msra.mxu0 %v270
    %1208 = vmatpush.msra.mxu0 %v269
    %1209 = vmatpush.msra.mxu0 %v268
    %1210 = vmatpush.msra.mxu0 %v267
    %1211 = vmatpush.msra.mxu0 %v266
    %1212 = vmatpush.msra.mxu0 %v265
    %1213 = vmatpush.msra.mxu0 %v264
    %1214 = vmatpush.msra.mxu0 %v263
    %1215 = vmatpush.msra.mxu0 %v262
    %1216 = vmatpush.msra.mxu0 %v261
    %1217 = vmatpush.msra.mxu0 %v260
    %1218 = vmatpush.msra.mxu0 %v259
    %1219 = vmatpush.msra.mxu0 %v258
    %1220 = vmatpush.msra.mxu0 %v257
    %1221 = vmatpush.msra.mxu0 %v256
    %1222 = vmatmul.f32.gmra.mxu0 %v488
    %v1223 = vpop.f32.mrf.mxu0
    %v1224 = vadd.f32 %v1204, %v1223
    %1225 = vdwg.mxu0
    %1226 = vmatpush.msra.mxu0 %v287
    %1227 = vmatpush.msra.mxu0 %v286
    %1228 = vmatpush.msra.mxu0 %v285
    %1229 = vmatpush.msra.mxu0 %v284
    %1230 = vmatpush.msra.mxu0 %v283
    %1231 = vmatpush.msra.mxu0 %v282
    %1232 = vmatpush.msra.mxu0 %v281
    %1233 = vmatpush.msra.mxu0 %v280
    %1234 = vmatpush.msra.mxu0 %v279
    %1235 = vmatpush.msra.mxu0 %v278
    %1236 = vmatpush.msra.mxu0 %v277
    %1237 = vmatpush.msra.mxu0 %v276
    %1238 = vmatpush.msra.mxu0 %v275
    %1239 = vmatpush.msra.mxu0 %v274
    %1240 = vmatpush.msra.mxu0 %v273
    %1241 = vmatpush.msra.mxu0 %v272
    %1242 = vmatmul.f32.gmra.mxu0 %v1182
    %v1243 = vpop.f32.mrf.mxu0
    %v1244 = vadd.f32 %v1224, %v1243
    %1245 = vdwg.mxu0
    %1246 = vmatpush.msra.mxu0 %v303
    %1247 = vmatpush.msra.mxu0 %v302
    %1248 = vmatpush.msra.mxu0 %v301
    %1249 = vmatpush.msra.mxu0 %v300
    %1250 = vmatpush.msra.mxu0 %v299
    %1251 = vmatpush.msra.mxu0 %v298
    %1252 = vmatpush.msra.mxu0 %v297
    %1253 = vmatpush.msra.mxu0 %v296
    %1254 = vmatpush.msra.mxu0 %v295
    %1255 = vmatpush.msra.mxu0 %v294
    %1256 = vmatpush.msra.mxu0 %v293
    %1257 = vmatpush.msra.mxu0 %v292
    %1258 = vmatpush.msra.mxu0 %v291
    %1259 = vmatpush.msra.mxu0 %v290
    %1260 = vmatpush.msra.mxu0 %v289
    %1261 = vmatpush.msra.mxu0 %v288
    %1262 = vmatmul.f32.gmra.mxu0 %v1185
    %v1263 = vpop.f32.mrf.mxu0
    %v1264 = vadd.f32 %v1244, %v1263
    %1265 = vdwg.mxu0
    %v1266 = vmax.f32 %v1264, 0.0
    %v1269 = vrot.slane %v228, 2
    %v1270 = vrot.slane %v236, 2
    %v1273 = vrot.slane %v229, 6
    %v1274 = vrot.slane %v237, 6
    %v1277 = vsel %vm316, %v1269, %v1273
    %v1278 = vsel %vm316, %v1270, %v1274
    %v1279 = vrot.slane %v1277, 4
    %v1280 = vsel %vm322, 0.0, %v1279
    %v1282 = vunpack.c.l.s4 1983009808
    %v1283 = vunpack.c.0.s8 %v1282
    %v1284 = vperm.slane %v1277, %v1283
    %v1286 = vunpack.c.l.s4 1983009808
    %v1287 = vunpack.c.0.s8 %v1286
    %v1288 = vperm.slane %v1280, %v1287
    %v1289 = vrot.slane %v1278, 4
    %v1290 = vsel %vm322, 0.0, %v1289
    %v1292 = vunpack.c.l.s4 1983009808
    %v1293 = vunpack.c.0.s8 %v1292
    %v1294 = vperm.slane %v1278, %v1293
    %v1296 = vunpack.c.l.s4 1983009808
    %v1297 = vunpack.c.0.s8 %v1296
    %v1298 = vperm.slane %v1290, %v1297
    %v1299 = vrot.slane %v1294, 4
    %v1300 = vsel %vm322, %v1299, %v1284
    %v1301 = vrot.slane %v1284, 4
    %v1302 = vsel %vm322, %v1294, %v1301
    %v1304 = vunpack.c.l.s4 1934713408
    %v1305 = vunpack.c.0.s8 %v1304
    %v1306 = vperm.slane %v1300, %v1305
    %v1308 = vunpack.c.l.s4 1934713408
    %v1309 = vunpack.c.0.s8 %v1308
    %v1310 = vperm.slane %v1302, %v1309
    %v1311 = vrot.slane %v1298, 4
    %v1312 = vsel %vm322, %v1311, %v1288
    %v1313 = vrot.slane %v1288, 4
    %v1314 = vsel %vm322, %v1298, %v1313
    %v1316 = vunpack.c.l.s4 1934713408
    %v1317 = vunpack.c.0.s8 %v1316
    %v1318 = vperm.slane %v1312, %v1317
    %v1320 = vunpack.c.l.s4 1934713408
    %v1321 = vunpack.c.0.s8 %v1320
    %v1322 = vperm.slane %v1314, %v1321
    %v1323 = vrot.slane %v1306, 4
    %v1324 = vsel %vm322, 0.0, %v1323
    %v1325 = vrot.slane %v1310, 4
    %v1326 = vsel %vm322, 0.0, %v1325
    %v1327 = vrot.slane %v1318, 4
    %v1328 = vsel %vm322, 0.0, %v1327
    %v1329 = vrot.slane %v1322, 4
    %v1330 = vsel %vm322, 0.0, %v1329
    %1332 = vrot.lane.b32.xlu0 %v1324, 32
    %v1333 = vpop.permute.xlu0 %1332
    %1336 = vrot.lane.b32.xlu0 %v1310, 64
    %v1337 = vpop.permute.xlu0 %1336
    %1340 = vrot.lane.b32.xlu0 %v1326, 96
    %v1341 = vpop.permute.xlu0 %1340
    %1344 = vrot.lane.b32.xlu0 %v1328, 32
    %v1345 = vpop.permute.xlu0 %1344
    %1348 = vrot.lane.b32.xlu0 %v1322, 64
    %v1349 = vpop.permute.xlu0 %1348
    %1352 = vrot.lane.b32.xlu0 %v1330, 96
    %v1353 = vpop.permute.xlu0 %1352
    %v1355 = vsel %vm474, %v1306, %v1333
    %v1356 = vsel %vm476, %v1355, %v1337
    %v1357 = vsel %vm478, %v1356, %v1341
    %v1358 = vsel %vm474, %v1318, %v1345
    %v1359 = vsel %vm476, %v1358, %v1349
    %v1360 = vsel %vm478, %v1359, %v1353
    %1361 = vmatpush.msra.mxu0 %v255
    %1362 = vmatpush.msra.mxu0 %v254
    %1363 = vmatpush.msra.mxu0 %v253
    %1364 = vmatpush.msra.mxu0 %v252
    %1365 = vmatpush.msra.mxu0 %v251
    %1366 = vmatpush.msra.mxu0 %v250
    %1367 = vmatpush.msra.mxu0 %v249
    %1368 = vmatpush.msra.mxu0 %v248
    %1369 = vmatpush.msra.mxu0 %v247
    %1370 = vmatpush.msra.mxu0 %v246
    %1371 = vmatpush.msra.mxu0 %v245
    %1372 = vmatpush.msra.mxu0 %v244
    %1373 = vmatpush.msra.mxu0 %v243
    %1374 = vmatpush.msra.mxu0 %v242
    %1375 = vmatpush.msra.mxu0 %v241
    %1376 = vmatpush.msra.mxu0 %v240
    %1377 = vmatmul.f32.gmra.mxu0 %v754
    %v1378 = vpop.f32.mrf.mxu0
    %v1379 = vadd.f32 0.0, %v1378
    %1380 = vdwg.mxu0
    %1381 = vmatpush.msra.mxu0 %v271
    %1382 = vmatpush.msra.mxu0 %v270
    %1383 = vmatpush.msra.mxu0 %v269
    %1384 = vmatpush.msra.mxu0 %v268
    %1385 = vmatpush.msra.mxu0 %v267
    %1386 = vmatpush.msra.mxu0 %v266
    %1387 = vmatpush.msra.mxu0 %v265
    %1388 = vmatpush.msra.mxu0 %v264
    %1389 = vmatpush.msra.mxu0 %v263
    %1390 = vmatpush.msra.mxu0 %v262
    %1391 = vmatpush.msra.mxu0 %v261
    %1392 = vmatpush.msra.mxu0 %v260
    %1393 = vmatpush.msra.mxu0 %v259
    %1394 = vmatpush.msra.mxu0 %v258
    %1395 = vmatpush.msra.mxu0 %v257
    %1396 = vmatpush.msra.mxu0 %v256
    %1397 = vmatmul.f32.gmra.mxu0 %v757
    %v1398 = vpop.f32.mrf.mxu0
    %v1399 = vadd.f32 %v1379, %v1398
    %1400 = vdwg.mxu0
    %1401 = vmatpush.msra.mxu0 %v287
    %1402 = vmatpush.msra.mxu0 %v286
    %1403 = vmatpush.msra.mxu0 %v285
    %1404 = vmatpush.msra.mxu0 %v284
    %1405 = vmatpush.msra.mxu0 %v283
    %1406 = vmatpush.msra.mxu0 %v282
    %1407 = vmatpush.msra.mxu0 %v281
    %1408 = vmatpush.msra.mxu0 %v280
    %1409 = vmatpush.msra.mxu0 %v279
    %1410 = vmatpush.msra.mxu0 %v278
    %1411 = vmatpush.msra.mxu0 %v277
    %1412 = vmatpush.msra.mxu0 %v276
    %1413 = vmatpush.msra.mxu0 %v275
    %1414 = vmatpush.msra.mxu0 %v274
    %1415 = vmatpush.msra.mxu0 %v273
    %1416 = vmatpush.msra.mxu0 %v272
    %1417 = vmatmul.f32.gmra.mxu0 %v1357
    %v1418 = vpop.f32.mrf.mxu0
    %v1419 = vadd.f32 %v1399, %v1418
    %1420 = vdwg.mxu0
    %1421 = vmatpush.msra.mxu0 %v303
    %1422 = vmatpush.msra.mxu0 %v302
    %1423 = vmatpush.msra.mxu0 %v301
    %1424 = vmatpush.msra.mxu0 %v300
    %1425 = vmatpush.msra.mxu0 %v299
    %1426 = vmatpush.msra.mxu0 %v298
    %1427 = vmatpush.msra.mxu0 %v297
    %1428 = vmatpush.msra.mxu0 %v296
    %1429 = vmatpush.msra.mxu0 %v295
    %1430 = vmatpush.msra.mxu0 %v294
    %1431 = vmatpush.msra.mxu0 %v293
    %1432 = vmatpush.msra.mxu0 %v292
    %1433 = vmatpush.msra.mxu0 %v291
    %1434 = vmatpush.msra.mxu0 %v290
    %1435 = vmatpush.msra.mxu0 %v289
    %1436 = vmatpush.msra.mxu0 %v288
    %1437 = vmatmul.f32.gmra.mxu0 %v1360
    %v1438 = vpop.f32.mrf.mxu0
    %v1439 = vadd.f32 %v1419, %v1438
    %1440 = vdwg.mxu0
    %v1441 = vmax.f32 %v1439, 0.0
    %v1442 = vrot.slane %v228, 4
    %v1443 = vrot.slane %v236, 4
    %v1446 = vsel %vm316, %v1442, %v229
    %v1447 = vsel %vm316, %v1443, %v237
    %v1448 = vrot.slane %v1446, 4
    %v1449 = vsel %vm322, 0.0, %v1448
    %v1451 = vunpack.c.l.s4 1983009808
    %v1452 = vunpack.c.0.s8 %v1451
    %v1453 = vperm.slane %v1446, %v1452
    %v1455 = vunpack.c.l.s4 1983009808
    %v1456 = vunpack.c.0.s8 %v1455
    %v1457 = vperm.slane %v1449, %v1456
    %v1458 = vrot.slane %v1447, 4
    %v1459 = vsel %vm322, 0.0, %v1458
    %v1461 = vunpack.c.l.s4 1983009808
    %v1462 = vunpack.c.0.s8 %v1461
    %v1463 = vperm.slane %v1447, %v1462
    %v1465 = vunpack.c.l.s4 1983009808
    %v1466 = vunpack.c.0.s8 %v1465
    %v1467 = vperm.slane %v1459, %v1466
    %v1468 = vrot.slane %v1463, 4
    %v1469 = vsel %vm322, %v1468, %v1453
    %v1470 = vrot.slane %v1453, 4
    %v1471 = vsel %vm322, %v1463, %v1470
    %v1473 = vunpack.c.l.s4 1934713408
    %v1474 = vunpack.c.0.s8 %v1473
    %v1475 = vperm.slane %v1469, %v1474
    %v1477 = vunpack.c.l.s4 1934713408
    %v1478 = vunpack.c.0.s8 %v1477
    %v1479 = vperm.slane %v1471, %v1478
    %v1480 = vrot.slane %v1467, 4
    %v1481 = vsel %vm322, %v1480, %v1457
    %v1482 = vrot.slane %v1457, 4
    %v1483 = vsel %vm322, %v1467, %v1482
    %v1485 = vunpack.c.l.s4 1934713408
    %v1486 = vunpack.c.0.s8 %v1485
    %v1487 = vperm.slane %v1481, %v1486
    %v1489 = vunpack.c.l.s4 1934713408
    %v1490 = vunpack.c.0.s8 %v1489
    %v1491 = vperm.slane %v1483, %v1490
    %v1492 = vrot.slane %v1475, 4
    %v1493 = vsel %vm322, 0.0, %v1492
    %v1494 = vrot.slane %v1479, 4
    %v1495 = vsel %vm322, 0.0, %v1494
    %v1496 = vrot.slane %v1487, 4
    %v1497 = vsel %vm322, 0.0, %v1496
    %v1498 = vrot.slane %v1491, 4
    %v1499 = vsel %vm322, 0.0, %v1498
    %1501 = vrot.lane.b32.xlu0 %v1493, 32
    %v1502 = vpop.permute.xlu0 %1501
    %1505 = vrot.lane.b32.xlu0 %v1479, 64
    %v1506 = vpop.permute.xlu0 %1505
    %1509 = vrot.lane.b32.xlu0 %v1495, 96
    %v1510 = vpop.permute.xlu0 %1509
    %1513 = vrot.lane.b32.xlu0 %v1497, 32
    %v1514 = vpop.permute.xlu0 %1513
    %1517 = vrot.lane.b32.xlu0 %v1491, 64
    %v1518 = vpop.permute.xlu0 %1517
    %1521 = vrot.lane.b32.xlu0 %v1499, 96
    %v1522 = vpop.permute.xlu0 %1521
    %v1524 = vsel %vm474, %v1475, %v1502
    %v1525 = vsel %vm476, %v1524, %v1506
    %v1526 = vsel %vm478, %v1525, %v1510
    %v1527 = vsel %vm474, %v1487, %v1514
    %v1528 = vsel %vm476, %v1527, %v1518
    %v1529 = vsel %vm478, %v1528, %v1522
    %1530 = vmatpush.msra.mxu0 %v255
    %1531 = vmatpush.msra.mxu0 %v254
    %1532 = vmatpush.msra.mxu0 %v253
    %1533 = vmatpush.msra.mxu0 %v252
    %1534 = vmatpush.msra.mxu0 %v251
    %1535 = vmatpush.msra.mxu0 %v250
    %1536 = vmatpush.msra.mxu0 %v249
    %1537 = vmatpush.msra.mxu0 %v248
    %1538 = vmatpush.msra.mxu0 %v247
    %1539 = vmatpush.msra.mxu0 %v246
    %1540 = vmatpush.msra.mxu0 %v245
    %1541 = vmatpush.msra.mxu0 %v244
    %1542 = vmatpush.msra.mxu0 %v243
    %1543 = vmatpush.msra.mxu0 %v242
    %1544 = vmatpush.msra.mxu0 %v241
    %1545 = vmatpush.msra.mxu0 %v240
    %1546 = vmatmul.f32.gmra.mxu0 %v1011
    %v1547 = vpop.f32.mrf.mxu0
    %v1548 = vadd.f32 0.0, %v1547
    %1549 = vdwg.mxu0
    %1550 = vmatpush.msra.mxu0 %v271
    %1551 = vmatpush.msra.mxu0 %v270
    %1552 = vmatpush.msra.mxu0 %v269
    %1553 = vmatpush.msra.mxu0 %v268
    %1554 = vmatpush.msra.mxu0 %v267
    %1555 = vmatpush.msra.mxu0 %v266
    %1556 = vmatpush.msra.mxu0 %v265
    %1557 = vmatpush.msra.mxu0 %v264
    %1558 = vmatpush.msra.mxu0 %v263
    %1559 = vmatpush.msra.mxu0 %v262
    %1560 = vmatpush.msra.mxu0 %v261
    %1561 = vmatpush.msra.mxu0 %v260
    %1562 = vmatpush.msra.mxu0 %v259
    %1563 = vmatpush.msra.mxu0 %v258
    %1564 = vmatpush.msra.mxu0 %v257
    %1565 = vmatpush.msra.mxu0 %v256
    %1566 = vmatmul.f32.gmra.mxu0 %v1014
    %v1567 = vpop.f32.mrf.mxu0
    %v1568 = vadd.f32 %v1548, %v1567
    %1569 = vdwg.mxu0
    %1570 = vmatpush.msra.mxu0 %v287
    %1571 = vmatpush.msra.mxu0 %v286
    %1572 = vmatpush.msra.mxu0 %v285
    %1573 = vmatpush.msra.mxu0 %v284
    %1574 = vmatpush.msra.mxu0 %v283
    %1575 = vmatpush.msra.mxu0 %v282
    %1576 = vmatpush.msra.mxu0 %v281
    %1577 = vmatpush.msra.mxu0 %v280
    %1578 = vmatpush.msra.mxu0 %v279
    %1579 = vmatpush.msra.mxu0 %v278
    %1580 = vmatpush.msra.mxu0 %v277
    %1581 = vmatpush.msra.mxu0 %v276
    %1582 = vmatpush.msra.mxu0 %v275
    %1583 = vmatpush.msra.mxu0 %v274
    %1584 = vmatpush.msra.mxu0 %v273
    %1585 = vmatpush.msra.mxu0 %v272
    %1586 = vmatmul.f32.gmra.mxu0 %v1526
    %v1587 = vpop.f32.mrf.mxu0
    %v1588 = vadd.f32 %v1568, %v1587
    %1589 = vdwg.mxu0
    %1590 = vmatpush.msra.mxu0 %v303
    %1591 = vmatpush.msra.mxu0 %v302
    %1592 = vmatpush.msra.mxu0 %v301
    %1593 = vmatpush.msra.mxu0 %v300
    %1594 = vmatpush.msra.mxu0 %v299
    %1595 = vmatpush.msra.mxu0 %v298
    %1596 = vmatpush.msra.mxu0 %v297
    %1597 = vmatpush.msra.mxu0 %v296
    %1598 = vmatpush.msra.mxu0 %v295
    %1599 = vmatpush.msra.mxu0 %v294
    %1600 = vmatpush.msra.mxu0 %v293
    %1601 = vmatpush.msra.mxu0 %v292
    %1602 = vmatpush.msra.mxu0 %v291
    %1603 = vmatpush.msra.mxu0 %v290
    %1604 = vmatpush.msra.mxu0 %v289
    %1605 = vmatpush.msra.mxu0 %v288
    %1606 = vmatmul.f32.gmra.mxu0 %v1529
    %v1607 = vpop.f32.mrf.mxu0
    %v1608 = vadd.f32 %v1588, %v1607
    %1609 = vdwg.mxu0
    %v1610 = vmax.f32 %v1608, 0.0
    %v1613 = vrot.slane %v231, 4
    %v1614 = vrot.slane %v239, 4
    %v1617 = vsel %vm316, %v230, %v1613
    %v1618 = vsel %vm316, %v238, %v1614
    %v1619 = vrot.slane %v1617, 4
    %v1620 = vsel %vm322, 0.0, %v1619
    %v1622 = vunpack.c.l.s4 1983009808
    %v1623 = vunpack.c.0.s8 %v1622
    %v1624 = vperm.slane %v1617, %v1623
    %v1626 = vunpack.c.l.s4 1983009808
    %v1627 = vunpack.c.0.s8 %v1626
    %v1628 = vperm.slane %v1620, %v1627
    %v1629 = vrot.slane %v1618, 4
    %v1630 = vsel %vm322, 0.0, %v1629
    %v1632 = vunpack.c.l.s4 1983009808
    %v1633 = vunpack.c.0.s8 %v1632
    %v1634 = vperm.slane %v1618, %v1633
    %v1636 = vunpack.c.l.s4 1983009808
    %v1637 = vunpack.c.0.s8 %v1636
    %v1638 = vperm.slane %v1630, %v1637
    %v1639 = vrot.slane %v1634, 4
    %v1640 = vsel %vm322, %v1639, %v1624
    %v1641 = vrot.slane %v1624, 4
    %v1642 = vsel %vm322, %v1634, %v1641
    %v1644 = vunpack.c.l.s4 1934713408
    %v1645 = vunpack.c.0.s8 %v1644
    %v1646 = vperm.slane %v1640, %v1645
    %v1648 = vunpack.c.l.s4 1934713408
    %v1649 = vunpack.c.0.s8 %v1648
    %v1650 = vperm.slane %v1642, %v1649
    %v1651 = vrot.slane %v1638, 4
    %v1652 = vsel %vm322, %v1651, %v1628
    %v1653 = vrot.slane %v1628, 4
    %v1654 = vsel %vm322, %v1638, %v1653
    %v1656 = vunpack.c.l.s4 1934713408
    %v1657 = vunpack.c.0.s8 %v1656
    %v1658 = vperm.slane %v1652, %v1657
    %v1660 = vunpack.c.l.s4 1934713408
    %v1661 = vunpack.c.0.s8 %v1660
    %v1662 = vperm.slane %v1654, %v1661
    %v1663 = vrot.slane %v1646, 4
    %v1664 = vsel %vm322, 0.0, %v1663
    %v1665 = vrot.slane %v1650, 4
    %v1666 = vsel %vm322, 0.0, %v1665
    %v1667 = vrot.slane %v1658, 4
    %v1668 = vsel %vm322, 0.0, %v1667
    %v1669 = vrot.slane %v1662, 4
    %v1670 = vsel %vm322, 0.0, %v1669
    %1672 = vrot.lane.b32.xlu0 %v1664, 32
    %v1673 = vpop.permute.xlu0 %1672
    %1676 = vrot.lane.b32.xlu0 %v1650, 64
    %v1677 = vpop.permute.xlu0 %1676
    %1680 = vrot.lane.b32.xlu0 %v1666, 96
    %v1681 = vpop.permute.xlu0 %1680
    %1684 = vrot.lane.b32.xlu0 %v1668, 32
    %v1685 = vpop.permute.xlu0 %1684
    %1688 = vrot.lane.b32.xlu0 %v1662, 64
    %v1689 = vpop.permute.xlu0 %1688
    %1692 = vrot.lane.b32.xlu0 %v1670, 96
    %v1693 = vpop.permute.xlu0 %1692
    %v1695 = vsel %vm474, %v1646, %v1673
    %v1696 = vsel %vm476, %v1695, %v1677
    %v1697 = vsel %vm478, %v1696, %v1681
    %v1698 = vsel %vm474, %v1658, %v1685
    %v1699 = vsel %vm476, %v1698, %v1689
    %v1700 = vsel %vm478, %v1699, %v1693
    %1701 = vmatpush.msra.mxu0 %v255
    %1702 = vmatpush.msra.mxu0 %v254
    %1703 = vmatpush.msra.mxu0 %v253
    %1704 = vmatpush.msra.mxu0 %v252
    %1705 = vmatpush.msra.mxu0 %v251
    %1706 = vmatpush.msra.mxu0 %v250
    %1707 = vmatpush.msra.mxu0 %v249
    %1708 = vmatpush.msra.mxu0 %v248
    %1709 = vmatpush.msra.mxu0 %v247
    %1710 = vmatpush.msra.mxu0 %v246
    %1711 = vmatpush.msra.mxu0 %v245
    %1712 = vmatpush.msra.mxu0 %v244
    %1713 = vmatpush.msra.mxu0 %v243
    %1714 = vmatpush.msra.mxu0 %v242
    %1715 = vmatpush.msra.mxu0 %v241
    %1716 = vmatpush.msra.mxu0 %v240
    %1717 = vmatmul.f32.gmra.mxu0 %v1182
    %v1718 = vpop.f32.mrf.mxu0
    %v1719 = vadd.f32 0.0, %v1718
    %1720 = vdwg.mxu0
    %1721 = vmatpush.msra.mxu0 %v271
    %1722 = vmatpush.msra.mxu0 %v270
    %1723 = vmatpush.msra.mxu0 %v269
    %1724 = vmatpush.msra.mxu0 %v268
    %1725 = vmatpush.msra.mxu0 %v267
    %1726 = vmatpush.msra.mxu0 %v266
    %1727 = vmatpush.msra.mxu0 %v265
    %1728 = vmatpush.msra.mxu0 %v264
    %1729 = vmatpush.msra.mxu0 %v263
    %1730 = vmatpush.msra.mxu0 %v262
    %1731 = vmatpush.msra.mxu0 %v261
    %1732 = vmatpush.msra.mxu0 %v260
    %1733 = vmatpush.msra.mxu0 %v259
    %1734 = vmatpush.msra.mxu0 %v258
    %1735 = vmatpush.msra.mxu0 %v257
    %1736 = vmatpush.msra.mxu0 %v256
    %1737 = vmatmul.f32.gmra.mxu0 %v1185
    %v1738 = vpop.f32.mrf.mxu0
    %v1739 = vadd.f32 %v1719, %v1738
    %1740 = vdwg.mxu0
    %1741 = vmatpush.msra.mxu0 %v287
    %1742 = vmatpush.msra.mxu0 %v286
    %1743 = vmatpush.msra.mxu0 %v285
    %1744 = vmatpush.msra.mxu0 %v284
    %1745 = vmatpush.msra.mxu0 %v283
    %1746 = vmatpush.msra.mxu0 %v282
    %1747 = vmatpush.msra.mxu0 %v281
    %1748 = vmatpush.msra.mxu0 %v280
    %1749 = vmatpush.msra.mxu0 %v279
    %1750 = vmatpush.msra.mxu0 %v278
    %1751 = vmatpush.msra.mxu0 %v277
    %1752 = vmatpush.msra.mxu0 %v276
    %1753 = vmatpush.msra.mxu0 %v275
    %1754 = vmatpush.msra.mxu0 %v274
    %1755 = vmatpush.msra.mxu0 %v273
    %1756 = vmatpush.msra.mxu0 %v272
    %1757 = vmatmul.f32.gmra.mxu0 %v1697
    %v1758 = vpop.f32.mrf.mxu0
    %v1759 = vadd.f32 %v1739, %v1758
    %1760 = vdwg.mxu0
    %1761 = vmatpush.msra.mxu0 %v303
    %1762 = vmatpush.msra.mxu0 %v302
    %1763 = vmatpush.msra.mxu0 %v301
    %1764 = vmatpush.msra.mxu0 %v300
    %1765 = vmatpush.msra.mxu0 %v299
    %1766 = vmatpush.msra.mxu0 %v298
    %1767 = vmatpush.msra.mxu0 %v297
    %1768 = vmatpush.msra.mxu0 %v296
    %1769 = vmatpush.msra.mxu0 %v295
    %1770 = vmatpush.msra.mxu0 %v294
    %1771 = vmatpush.msra.mxu0 %v293
    %1772 = vmatpush.msra.mxu0 %v292
    %1773 = vmatpush.msra.mxu0 %v291
    %1774 = vmatpush.msra.mxu0 %v290
    %1775 = vmatpush.msra.mxu0 %v289
    %1776 = vmatpush.msra.mxu0 %v288
    %1777 = vmatmul.f32.gmra.mxu0 %v1700
    %v1778 = vpop.f32.mrf.mxu0
    %v1779 = vadd.f32 %v1759, %v1778
    %1780 = vdwg.mxu0
    %v1781 = vmax.f32 %v1779, 0.0
    %v1784 = vrot.slane %v230, 2
    %v1785 = vrot.slane %v238, 2
    %v1788 = vrot.slane %v231, 6
    %v1789 = vrot.slane %v239, 6
    %v1792 = vsel %vm316, %v1784, %v1788
    %v1793 = vsel %vm316, %v1785, %v1789
    %v1794 = vrot.slane %v1792, 4
    %v1795 = vsel %vm322, 0.0, %v1794
    %v1797 = vunpack.c.l.s4 1983009808
    %v1798 = vunpack.c.0.s8 %v1797
    %v1799 = vperm.slane %v1792, %v1798
    %v1801 = vunpack.c.l.s4 1983009808
    %v1802 = vunpack.c.0.s8 %v1801
    %v1803 = vperm.slane %v1795, %v1802
    %v1804 = vrot.slane %v1793, 4
    %v1805 = vsel %vm322, 0.0, %v1804
    %v1807 = vunpack.c.l.s4 1983009808
    %v1808 = vunpack.c.0.s8 %v1807
    %v1809 = vperm.slane %v1793, %v1808
    %v1811 = vunpack.c.l.s4 1983009808
    %v1812 = vunpack.c.0.s8 %v1811
    %v1813 = vperm.slane %v1805, %v1812
    %v1814 = vrot.slane %v1809, 4
    %v1815 = vsel %vm322, %v1814, %v1799
    %v1816 = vrot.slane %v1799, 4
    %v1817 = vsel %vm322, %v1809, %v1816
    %v1819 = vunpack.c.l.s4 1934713408
    %v1820 = vunpack.c.0.s8 %v1819
    %v1821 = vperm.slane %v1815, %v1820
    %v1823 = vunpack.c.l.s4 1934713408
    %v1824 = vunpack.c.0.s8 %v1823
    %v1825 = vperm.slane %v1817, %v1824
    %v1826 = vrot.slane %v1813, 4
    %v1827 = vsel %vm322, %v1826, %v1803
    %v1828 = vrot.slane %v1803, 4
    %v1829 = vsel %vm322, %v1813, %v1828
    %v1831 = vunpack.c.l.s4 1934713408
    %v1832 = vunpack.c.0.s8 %v1831
    %v1833 = vperm.slane %v1827, %v1832
    %v1835 = vunpack.c.l.s4 1934713408
    %v1836 = vunpack.c.0.s8 %v1835
    %v1837 = vperm.slane %v1829, %v1836
    %v1838 = vrot.slane %v1821, 4
    %v1839 = vsel %vm322, 0.0, %v1838
    %v1840 = vrot.slane %v1825, 4
    %v1841 = vsel %vm322, 0.0, %v1840
    %v1842 = vrot.slane %v1833, 4
    %v1843 = vsel %vm322, 0.0, %v1842
    %v1844 = vrot.slane %v1837, 4
    %v1845 = vsel %vm322, 0.0, %v1844
    %1847 = vrot.lane.b32.xlu0 %v1839, 32
    %v1848 = vpop.permute.xlu0 %1847
    %1851 = vrot.lane.b32.xlu0 %v1825, 64
    %v1852 = vpop.permute.xlu0 %1851
    %1855 = vrot.lane.b32.xlu0 %v1841, 96
    %v1856 = vpop.permute.xlu0 %1855
    %1859 = vrot.lane.b32.xlu0 %v1843, 32
    %v1860 = vpop.permute.xlu0 %1859
    %1863 = vrot.lane.b32.xlu0 %v1837, 64
    %v1864 = vpop.permute.xlu0 %1863
    %1867 = vrot.lane.b32.xlu0 %v1845, 96
    %v1868 = vpop.permute.xlu0 %1867
    %v1870 = vsel %vm474, %v1821, %v1848
    %v1871 = vsel %vm476, %v1870, %v1852
    %v1872 = vsel %vm478, %v1871, %v1856
    %v1873 = vsel %vm474, %v1833, %v1860
    %v1874 = vsel %vm476, %v1873, %v1864
    %v1875 = vsel %vm478, %v1874, %v1868
    %1876 = vmatpush.msra.mxu0 %v255
    %1877 = vmatpush.msra.mxu0 %v254
    %1878 = vmatpush.msra.mxu0 %v253
    %1879 = vmatpush.msra.mxu0 %v252
    %1880 = vmatpush.msra.mxu0 %v251
    %1881 = vmatpush.msra.mxu0 %v250
    %1882 = vmatpush.msra.mxu0 %v249
    %1883 = vmatpush.msra.mxu0 %v248
    %1884 = vmatpush.msra.mxu0 %v247
    %1885 = vmatpush.msra.mxu0 %v246
    %1886 = vmatpush.msra.mxu0 %v245
    %1887 = vmatpush.msra.mxu0 %v244
    %1888 = vmatpush.msra.mxu0 %v243
    %1889 = vmatpush.msra.mxu0 %v242
    %1890 = vmatpush.msra.mxu0 %v241
    %1891 = vmatpush.msra.mxu0 %v240
    %1892 = vmatmul.f32.gmra.mxu0 %v1357
    %v1893 = vpop.f32.mrf.mxu0
    %v1894 = vadd.f32 0.0, %v1893
    %1895 = vdwg.mxu0
    %1896 = vmatpush.msra.mxu0 %v271
    %1897 = vmatpush.msra.mxu0 %v270
    %1898 = vmatpush.msra.mxu0 %v269
    %1899 = vmatpush.msra.mxu0 %v268
    %1900 = vmatpush.msra.mxu0 %v267
    %1901 = vmatpush.msra.mxu0 %v266
    %1902 = vmatpush.msra.mxu0 %v265
    %1903 = vmatpush.msra.mxu0 %v264
    %1904 = vmatpush.msra.mxu0 %v263
    %1905 = vmatpush.msra.mxu0 %v262
    %1906 = vmatpush.msra.mxu0 %v261
    %1907 = vmatpush.msra.mxu0 %v260
    %1908 = vmatpush.msra.mxu0 %v259
    %1909 = vmatpush.msra.mxu0 %v258
    %1910 = vmatpush.msra.mxu0 %v257
    %1911 = vmatpush.msra.mxu0 %v256
    %1912 = vmatmul.f32.gmra.mxu0 %v1360
    %v1913 = vpop.f32.mrf.mxu0
    %v1914 = vadd.f32 %v1894, %v1913
    %1915 = vdwg.mxu0
    %1916 = vmatpush.msra.mxu0 %v287
    %1917 = vmatpush.msra.mxu0 %v286
    %1918 = vmatpush.msra.mxu0 %v285
    %1919 = vmatpush.msra.mxu0 %v284
    %1920 = vmatpush.msra.mxu0 %v283
    %1921 = vmatpush.msra.mxu0 %v282
    %1922 = vmatpush.msra.mxu0 %v281
    %1923 = vmatpush.msra.mxu0 %v280
    %1924 = vmatpush.msra.mxu0 %v279
    %1925 = vmatpush.msra.mxu0 %v278
    %1926 = vmatpush.msra.mxu0 %v277
    %1927 = vmatpush.msra.mxu0 %v276
    %1928 = vmatpush.msra.mxu0 %v275
    %1929 = vmatpush.msra.mxu0 %v274
    %1930 = vmatpush.msra.mxu0 %v273
    %1931 = vmatpush.msra.mxu0 %v272
    %1932 = vmatmul.f32.gmra.mxu0 %v1872
    %v1933 = vpop.f32.mrf.mxu0
    %v1934 = vadd.f32 %v1914, %v1933
    %1935 = vdwg.mxu0
    %1936 = vmatpush.msra.mxu0 %v303
    %1937 = vmatpush.msra.mxu0 %v302
    %1938 = vmatpush.msra.mxu0 %v301
    %1939 = vmatpush.msra.mxu0 %v300
    %1940 = vmatpush.msra.mxu0 %v299
    %1941 = vmatpush.msra.mxu0 %v298
    %1942 = vmatpush.msra.mxu0 %v297
    %1943 = vmatpush.msra.mxu0 %v296
    %1944 = vmatpush.msra.mxu0 %v295
    %1945 = vmatpush.msra.mxu0 %v294
    %1946 = vmatpush.msra.mxu0 %v293
    %1947 = vmatpush.msra.mxu0 %v292
    %1948 = vmatpush.msra.mxu0 %v291
    %1949 = vmatpush.msra.mxu0 %v290
    %1950 = vmatpush.msra.mxu0 %v289
    %1951 = vmatpush.msra.mxu0 %v288
    %1952 = vmatmul.f32.gmra.mxu0 %v1875
    %v1953 = vpop.f32.mrf.mxu0
    %v1954 = vadd.f32 %v1934, %v1953
    %1955 = vdwg.mxu0
    %v1956 = vmax.f32 %v1954, 0.0
    %v1957 = vrot.slane %v230, 4
    %v1958 = vrot.slane %v238, 4
    %v1961 = vsel %vm316, %v1957, %v231
    %v1962 = vsel %vm316, %v1958, %v239
    %v1963 = vrot.slane %v1961, 4
    %v1964 = vsel %vm322, 0.0, %v1963
    %v1966 = vunpack.c.l.s4 1983009808
    %v1967 = vunpack.c.0.s8 %v1966
    %v1968 = vperm.slane %v1961, %v1967
    %v1970 = vunpack.c.l.s4 1983009808
    %v1971 = vunpack.c.0.s8 %v1970
    %v1972 = vperm.slane %v1964, %v1971
    %v1973 = vrot.slane %v1962, 4
    %v1974 = vsel %vm322, 0.0, %v1973
    %v1976 = vunpack.c.l.s4 1983009808
    %v1977 = vunpack.c.0.s8 %v1976
    %v1978 = vperm.slane %v1962, %v1977
    %v1980 = vunpack.c.l.s4 1983009808
    %v1981 = vunpack.c.0.s8 %v1980
    %v1982 = vperm.slane %v1974, %v1981
    %v1983 = vrot.slane %v1978, 4
    %v1984 = vsel %vm322, %v1983, %v1968
    %v1985 = vrot.slane %v1968, 4
    %v1986 = vsel %vm322, %v1978, %v1985
    %v1988 = vunpack.c.l.s4 1934713408
    %v1989 = vunpack.c.0.s8 %v1988
    %v1990 = vperm.slane %v1984, %v1989
    %v1992 = vunpack.c.l.s4 1934713408
    %v1993 = vunpack.c.0.s8 %v1992
    %v1994 = vperm.slane %v1986, %v1993
    %v1995 = vrot.slane %v1982, 4
    %v1996 = vsel %vm322, %v1995, %v1972
    %v1997 = vrot.slane %v1972, 4
    %v1998 = vsel %vm322, %v1982, %v1997
    %v2000 = vunpack.c.l.s4 1934713408
    %v2001 = vunpack.c.0.s8 %v2000
    %v2002 = vperm.slane %v1996, %v2001
    %v2004 = vunpack.c.l.s4 1934713408
    %v2005 = vunpack.c.0.s8 %v2004
    %v2006 = vperm.slane %v1998, %v2005
    %v2007 = vrot.slane %v1990, 4
    %v2008 = vsel %vm322, 0.0, %v2007
    %v2009 = vrot.slane %v1994, 4
    %v2010 = vsel %vm322, 0.0, %v2009
    %v2011 = vrot.slane %v2002, 4
    %v2012 = vsel %vm322, 0.0, %v2011
    %v2013 = vrot.slane %v2006, 4
    %v2014 = vsel %vm322, 0.0, %v2013
    %2016 = vrot.lane.b32.xlu0 %v2008, 32
    %v2017 = vpop.permute.xlu0 %2016
    %2020 = vrot.lane.b32.xlu0 %v1994, 64
    %v2021 = vpop.permute.xlu0 %2020
    %2024 = vrot.lane.b32.xlu0 %v2010, 96
    %v2025 = vpop.permute.xlu0 %2024
    %2028 = vrot.lane.b32.xlu0 %v2012, 32
    %v2029 = vpop.permute.xlu0 %2028
    %2032 = vrot.lane.b32.xlu0 %v2006, 64
    %v2033 = vpop.permute.xlu0 %2032
    %2036 = vrot.lane.b32.xlu0 %v2014, 96
    %v2037 = vpop.permute.xlu0 %2036
    %v2039 = vsel %vm474, %v1990, %v2017
    %v2040 = vsel %vm476, %v2039, %v2021
    %v2041 = vsel %vm478, %v2040, %v2025
    %v2042 = vsel %vm474, %v2002, %v2029
    %v2043 = vsel %vm476, %v2042, %v2033
    %v2044 = vsel %vm478, %v2043, %v2037
    %2045 = vmatpush.msra.mxu0 %v255
    %2046 = vmatpush.msra.mxu0 %v254
    %2047 = vmatpush.msra.mxu0 %v253
    %2048 = vmatpush.msra.mxu0 %v252
    %2049 = vmatpush.msra.mxu0 %v251
    %2050 = vmatpush.msra.mxu0 %v250
    %2051 = vmatpush.msra.mxu0 %v249
    %2052 = vmatpush.msra.mxu0 %v248
    %2053 = vmatpush.msra.mxu0 %v247
    %2054 = vmatpush.msra.mxu0 %v246
    %2055 = vmatpush.msra.mxu0 %v245
    %2056 = vmatpush.msra.mxu0 %v244
    %2057 = vmatpush.msra.mxu0 %v243
    %2058 = vmatpush.msra.mxu0 %v242
    %2059 = vmatpush.msra.mxu0 %v241
    %2060 = vmatpush.msra.mxu0 %v240
    %2061 = vmatmul.f32.gmra.mxu0 %v1526
    %v2062 = vpop.f32.mrf.mxu0
    %v2063 = vadd.f32 0.0, %v2062
    %2064 = vdwg.mxu0
    %2065 = vmatpush.msra.mxu0 %v271
    %2066 = vmatpush.msra.mxu0 %v270
    %2067 = vmatpush.msra.mxu0 %v269
    %2068 = vmatpush.msra.mxu0 %v268
    %2069 = vmatpush.msra.mxu0 %v267
    %2070 = vmatpush.msra.mxu0 %v266
    %2071 = vmatpush.msra.mxu0 %v265
    %2072 = vmatpush.msra.mxu0 %v264
    %2073 = vmatpush.msra.mxu0 %v263
    %2074 = vmatpush.msra.mxu0 %v262
    %2075 = vmatpush.msra.mxu0 %v261
    %2076 = vmatpush.msra.mxu0 %v260
    %2077 = vmatpush.msra.mxu0 %v259
    %2078 = vmatpush.msra.mxu0 %v258
    %2079 = vmatpush.msra.mxu0 %v257
    %2080 = vmatpush.msra.mxu0 %v256
    %2081 = vmatmul.f32.gmra.mxu0 %v1529
    %v2082 = vpop.f32.mrf.mxu0
    %v2083 = vadd.f32 %v2063, %v2082
    %2084 = vdwg.mxu0
    %2085 = vmatpush.msra.mxu0 %v287
    %2086 = vmatpush.msra.mxu0 %v286
    %2087 = vmatpush.msra.mxu0 %v285
    %2088 = vmatpush.msra.mxu0 %v284
    %2089 = vmatpush.msra.mxu0 %v283
    %2090 = vmatpush.msra.mxu0 %v282
    %2091 = vmatpush.msra.mxu0 %v281
    %2092 = vmatpush.msra.mxu0 %v280
    %2093 = vmatpush.msra.mxu0 %v279
    %2094 = vmatpush.msra.mxu0 %v278
    %2095 = vmatpush.msra.mxu0 %v277
    %2096 = vmatpush.msra.mxu0 %v276
    %2097 = vmatpush.msra.mxu0 %v275
    %2098 = vmatpush.msra.mxu0 %v274
    %2099 = vmatpush.msra.mxu0 %v273
    %2100 = vmatpush.msra.mxu0 %v272
    %2101 = vmatmul.f32.gmra.mxu0 %v2041
    %v2102 = vpop.f32.mrf.mxu0
    %v2103 = vadd.f32 %v2083, %v2102
    %2104 = vdwg.mxu0
    %2105 = vmatpush.msra.mxu0 %v303
    %2106 = vmatpush.msra.mxu0 %v302
    %2107 = vmatpush.msra.mxu0 %v301
    %2108 = vmatpush.msra.mxu0 %v300
    %2109 = vmatpush.msra.mxu0 %v299
    %2110 = vmatpush.msra.mxu0 %v298
    %2111 = vmatpush.msra.mxu0 %v297
    %2112 = vmatpush.msra.mxu0 %v296
    %2113 = vmatpush.msra.mxu0 %v295
    %2114 = vmatpush.msra.mxu0 %v294
    %2115 = vmatpush.msra.mxu0 %v293
    %2116 = vmatpush.msra.mxu0 %v292
    %2117 = vmatpush.msra.mxu0 %v291
    %2118 = vmatpush.msra.mxu0 %v290
    %2119 = vmatpush.msra.mxu0 %v289
    %2120 = vmatpush.msra.mxu0 %v288
    %2121 = vmatmul.f32.gmra.mxu0 %v2044
    %v2122 = vpop.f32.mrf.mxu0
    %v2123 = vadd.f32 %v2103, %v2122
    %2124 = vdwg.mxu0
    %v2125 = vmax.f32 %v2123, 0.0
    %2127 = vrot.lane.b32.xlu0 %v838, 64
    %v2128 = vpop.permute.xlu0 %2127
    %2131 = vrot.lane.b32.xlu0 %v1266, 64
    %v2132 = vpop.permute.xlu0 %2131
    %2135 = vrot.lane.b32.xlu0 %v1610, 64
    %v2136 = vpop.permute.xlu0 %2135
    %2139 = vrot.lane.b32.xlu0 %v1956, 64
    %v2140 = vpop.permute.xlu0 %2139
    %v2142 = vsel %vm476, %v569, %v2128
    %v2143 = vsel %vm476, %v1095, %v2132
    %v2144 = vsel %vm476, %v1441, %v2136
    %v2145 = vsel %vm476, %v1781, %v2140
    %v2146 = vld [vmem:[%s3] sm:$0xff]
    %v2147 = vld [vmem:[%s3 + $0x8] sm:$0xff]
    %v2148 = vld [vmem:[%s3 + $0x10] sm:$0xff]
    %v2149 = vld [vmem:[%s3 + $0x18] sm:$0xff]
    %v2150 = vld [vmem:[%s3 + $0x20] sm:$0xff]
    %v2151 = vld [vmem:[%s3 + $0x28] sm:$0xff]
    %v2152 = vld [vmem:[%s3 + $0x30] sm:$0xff]
    %v2153 = vld [vmem:[%s3 + $0x38] sm:$0xff]
    %v2154 = vld [vmem:[%s3 + $0x40] sm:$0xff]
    %v2155 = vld [vmem:[%s3 + $0x48] sm:$0xff]
    %v2156 = vld [vmem:[%s3 + $0x50] sm:$0xff]
    %v2157 = vld [vmem:[%s3 + $0x58] sm:$0xff]
    %v2158 = vld [vmem:[%s3 + $0x60] sm:$0xff]
    %v2159 = vld [vmem:[%s3 + $0x68] sm:$0xff]
    %v2160 = vld [vmem:[%s3 + $0x70] sm:$0xff]
    %v2161 = vld [vmem:[%s3 + $0x78] sm:$0xff]
    %v2162 = vld [vmem:[%s3 + $0x80] sm:$0xff]
    %v2163 = vld [vmem:[%s3 + $0x88] sm:$0xff]
    %v2164 = vld [vmem:[%s3 + $0x90] sm:$0xff]
    %v2165 = vld [vmem:[%s3 + $0x98] sm:$0xff]
    %v2166 = vld [vmem:[%s3 + $0xa0] sm:$0xff]
    %v2167 = vld [vmem:[%s3 + $0xa8] sm:$0xff]
    %v2168 = vld [vmem:[%s3 + $0xb0] sm:$0xff]
    %v2169 = vld [vmem:[%s3 + $0xb8] sm:$0xff]
    %v2170 = vld [vmem:[%s3 + $0xc0] sm:$0xff]
    %v2171 = vld [vmem:[%s3 + $0xc8] sm:$0xff]
    %v2172 = vld [vmem:[%s3 + $0xd0] sm:$0xff]
    %v2173 = vld [vmem:[%s3 + $0xd8] sm:$0xff]
    %v2174 = vld [vmem:[%s3 + $0xe0] sm:$0xff]
    %v2175 = vld [vmem:[%s3 + $0xe8] sm:$0xff]
    %v2176 = vld [vmem:[%s3 + $0xf0] sm:$0xff]
    %v2177 = vld [vmem:[%s3 + $0xf8] sm:$0xff]
    %v2178 = vld [vmem:[%s3 + $0x100] sm:$0xff]
    %v2179 = vld [vmem:[%s3 + $0x108] sm:$0xff]
    %v2180 = vld [vmem:[%s3 + $0x110] sm:$0xff]
    %v2181 = vld [vmem:[%s3 + $0x118] sm:$0xff]
    %v2182 = vld [vmem:[%s3 + $0x120] sm:$0xff]
    %v2183 = vld [vmem:[%s3 + $0x128] sm:$0xff]
    %v2184 = vld [vmem:[%s3 + $0x130] sm:$0xff]
    %v2185 = vld [vmem:[%s3 + $0x138] sm:$0xff]
    %v2186 = vld [vmem:[%s3 + $0x140] sm:$0xff]
    %v2187 = vld [vmem:[%s3 + $0x148] sm:$0xff]
    %v2188 = vld [vmem:[%s3 + $0x150] sm:$0xff]
    %v2189 = vld [vmem:[%s3 + $0x158] sm:$0xff]
    %v2190 = vld [vmem:[%s3 + $0x160] sm:$0xff]
    %v2191 = vld [vmem:[%s3 + $0x168] sm:$0xff]
    %v2192 = vld [vmem:[%s3 + $0x170] sm:$0xff]
    %v2193 = vld [vmem:[%s3 + $0x178] sm:$0xff]
    %v2194 = vld [vmem:[%s3 + $0x180] sm:$0xff]
    %v2195 = vld [vmem:[%s3 + $0x188] sm:$0xff]
    %v2196 = vld [vmem:[%s3 + $0x190] sm:$0xff]
    %v2197 = vld [vmem:[%s3 + $0x198] sm:$0xff]
    %v2198 = vld [vmem:[%s3 + $0x1a0] sm:$0xff]
    %v2199 = vld [vmem:[%s3 + $0x1a8] sm:$0xff]
    %v2200 = vld [vmem:[%s3 + $0x1b0] sm:$0xff]
    %v2201 = vld [vmem:[%s3 + $0x1b8] sm:$0xff]
    %v2202 = vld [vmem:[%s3 + $0x1c0] sm:$0xff]
    %v2203 = vld [vmem:[%s3 + $0x1c8] sm:$0xff]
    %v2204 = vld [vmem:[%s3 + $0x1d0] sm:$0xff]
    %v2205 = vld [vmem:[%s3 + $0x1d8] sm:$0xff]
    %v2206 = vld [vmem:[%s3 + $0x1e0] sm:$0xff]
    %v2207 = vld [vmem:[%s3 + $0x1e8] sm:$0xff]
    %v2208 = vld [vmem:[%s3 + $0x1f0] sm:$0xff]
    %v2209 = vld [vmem:[%s3 + $0x1f8] sm:$0xff]
    %v2210 = vld [vmem:[%s3 + $0x200] sm:$0xff]
    %v2211 = vld [vmem:[%s3 + $0x208] sm:$0xff]
    %v2212 = vld [vmem:[%s3 + $0x210] sm:$0xff]
    %v2213 = vld [vmem:[%s3 + $0x218] sm:$0xff]
    %v2214 = vld [vmem:[%s3 + $0x220] sm:$0xff]
    %v2215 = vld [vmem:[%s3 + $0x228] sm:$0xff]
    %v2216 = vld [vmem:[%s3 + $0x230] sm:$0xff]
    %v2217 = vld [vmem:[%s3 + $0x238] sm:$0xff]
    %v2219 = vsel %vm476, %v2125, 0
    %2221 = vmatpush.msra.mxu0 %v2161
    %2222 = vmatpush.msra.mxu0 %v2160
    %2223 = vmatpush.msra.mxu0 %v2159
    %2224 = vmatpush.msra.mxu0 %v2158
    %2225 = vmatpush.msra.mxu0 %v2157
    %2226 = vmatpush.msra.mxu0 %v2156
    %2227 = vmatpush.msra.mxu0 %v2155
    %2228 = vmatpush.msra.mxu0 %v2154
    %2229 = vmatpush.msra.mxu0 %v2153
    %2230 = vmatpush.msra.mxu0 %v2152
    %2231 = vmatpush.msra.mxu0 %v2151
    %2232 = vmatpush.msra.mxu0 %v2150
    %2233 = vmatpush.msra.mxu0 %v2149
    %2234 = vmatpush.msra.mxu0 %v2148
    %2235 = vmatpush.msra.mxu0 %v2147
    %2236 = vmatpush.msra.mxu0 %v2146
    %2237 = vmatmul.f32.gmra.mxu0 %v2142
    %v2238 = vpop.f32.mrf.mxu0
    %v2239 = vadd.f32 0.0, %v2238
    %2240 = vdwg.mxu0
    %2241 = vmatpush.msra.mxu0 %v2177
    %2242 = vmatpush.msra.mxu0 %v2176
    %2243 = vmatpush.msra.mxu0 %v2175
    %2244 = vmatpush.msra.mxu0 %v2174
    %2245 = vmatpush.msra.mxu0 %v2173
    %2246 = vmatpush.msra.mxu0 %v2172
    %2247 = vmatpush.msra.mxu0 %v2171
    %2248 = vmatpush.msra.mxu0 %v2170
    %2249 = vmatpush.msra.mxu0 %v2169
    %2250 = vmatpush.msra.mxu0 %v2168
    %2251 = vmatpush.msra.mxu0 %v2167
    %2252 = vmatpush.msra.mxu0 %v2166
    %2253 = vmatpush.msra.mxu0 %v2165
    %2254 = vmatpush.msra.mxu0 %v2164
    %2255 = vmatpush.msra.mxu0 %v2163
    %2256 = vmatpush.msra.mxu0 %v2162
    %2257 = vmatmul.f32.gmra.mxu0 %v2143
    %v2258 = vpop.f32.mrf.mxu0
    %v2259 = vadd.f32 %v2239, %v2258
    %2260 = vdwg.mxu0
    %2261 = vmatpush.msra.mxu0 %v2193
    %2262 = vmatpush.msra.mxu0 %v2192
    %2263 = vmatpush.msra.mxu0 %v2191
    %2264 = vmatpush.msra.mxu0 %v2190
    %2265 = vmatpush.msra.mxu0 %v2189
    %2266 = vmatpush.msra.mxu0 %v2188
    %2267 = vmatpush.msra.mxu0 %v2187
    %2268 = vmatpush.msra.mxu0 %v2186
    %2269 = vmatpush.msra.mxu0 %v2185
    %2270 = vmatpush.msra.mxu0 %v2184
    %2271 = vmatpush.msra.mxu0 %v2183
    %2272 = vmatpush.msra.mxu0 %v2182
    %2273 = vmatpush.msra.mxu0 %v2181
    %2274 = vmatpush.msra.mxu0 %v2180
    %2275 = vmatpush.msra.mxu0 %v2179
    %2276 = vmatpush.msra.mxu0 %v2178
    %2277 = vmatmul.f32.gmra.mxu0 %v2144
    %v2278 = vpop.f32.mrf.mxu0
    %v2279 = vadd.f32 %v2259, %v2278
    %2280 = vdwg.mxu0
    %2281 = vmatpush.msra.mxu0 %v2209
    %2282 = vmatpush.msra.mxu0 %v2208
    %2283 = vmatpush.msra.mxu0 %v2207
    %2284 = vmatpush.msra.mxu0 %v2206
    %2285 = vmatpush.msra.mxu0 %v2205
    %2286 = vmatpush.msra.mxu0 %v2204
    %2287 = vmatpush.msra.mxu0 %v2203
    %2288 = vmatpush.msra.mxu0 %v2202
    %2289 = vmatpush.msra.mxu0 %v2201
    %2290 = vmatpush.msra.mxu0 %v2200
    %2291 = vmatpush.msra.mxu0 %v2199
    %2292 = vmatpush.msra.mxu0 %v2198
    %2293 = vmatpush.msra.mxu0 %v2197
    %2294 = vmatpush.msra.mxu0 %v2196
    %2295 = vmatpush.msra.mxu0 %v2195
    %2296 = vmatpush.msra.mxu0 %v2194
    %2297 = vmatmul.f32.gmra.mxu0 %v2145
    %v2298 = vpop.f32.mrf.mxu0
    %v2299 = vadd.f32 %v2279, %v2298
    %2300 = vdwg.mxu0
    %2301 = vmatpush.msra.mxu0 0.0
    %2302 = vmatpush.msra.mxu0 0.0
    %2303 = vmatpush.msra.mxu0 0.0
    %2304 = vmatpush.msra.mxu0 0.0
    %2305 = vmatpush.msra.mxu0 0.0
    %2306 = vmatpush.msra.mxu0 0.0
    %2307 = vmatpush.msra.mxu0 0.0
    %2308 = vmatpush.msra.mxu0 0.0
    %2309 = vmatpush.msra.mxu0 %v2217
    %2310 = vmatpush.msra.mxu0 %v2216
    %2311 = vmatpush.msra.mxu0 %v2215
    %2312 = vmatpush.msra.mxu0 %v2214
    %2313 = vmatpush.msra.mxu0 %v2213
    %2314 = vmatpush.msra.mxu0 %v2212
    %2315 = vmatpush.msra.mxu0 %v2211
    %2316 = vmatpush.msra.mxu0 %v2210
    %2317 = vmatmul.f32.gmra.mxu0 %v2219
    %v2318 = vpop.f32.mrf.mxu0
    %v2319 = vadd.f32 %v2299, %v2318
    %2320 = vdwg.mxu0
    %v2321 = vmax.f32 %v2319, 0.0
    %v2322 = vld [vmem:[%s4] sm:$0xff]
    %v2323 = vld [vmem:[%s4 + $0x8] sm:$0xff]
    %v2324 = vld [vmem:[%s4 + $0x10] sm:$0xff]
    %v2325 = vld [vmem:[%s4 + $0x18] sm:$0xff]
    %v2326 = vld [vmem:[%s4 + $0x20] sm:$0xff]
    %v2327 = vld [vmem:[%s4 + $0x28] sm:$0xff]
    %v2328 = vld [vmem:[%s4 + $0x30] sm:$0xff]
    %v2329 = vld [vmem:[%s4 + $0x38] sm:$0xff]
    %v2330 = vld [vmem:[%s4 + $0x40] sm:$0xff]
    %v2331 = vld [vmem:[%s4 + $0x48] sm:$0xff]
    %v2332 = vld [vmem:[%s4 + $0x50] sm:$0xff]
    %v2333 = vld [vmem:[%s4 + $0x58] sm:$0xff]
    %v2334 = vld [vmem:[%s4 + $0x60] sm:$0xff]
    %v2335 = vld [vmem:[%s4 + $0x68] sm:$0xff]
    %v2336 = vld [vmem:[%s4 + $0x70] sm:$0xff]
    %v2337 = vld [vmem:[%s4 + $0x78] sm:$0xff]
    %v2338 = vld [vmem:[%s4 + $0x80] sm:$0xff]
    %v2339 = vld [vmem:[%s4 + $0x88] sm:$0xff]
    %v2340 = vld [vmem:[%s4 + $0x90] sm:$0xff]
    %v2341 = vld [vmem:[%s4 + $0x98] sm:$0xff]
    %v2342 = vld [vmem:[%s4 + $0xa0] sm:$0xff]
    %v2343 = vld [vmem:[%s4 + $0xa8] sm:$0xff]
    %v2344 = vld [vmem:[%s4 + $0xb0] sm:$0xff]
    %v2345 = vld [vmem:[%s4 + $0xb8] sm:$0xff]
    %v2346 = vld [vmem:[%s4 + $0xc0] sm:$0xff]
    %v2347 = vld [vmem:[%s4 + $0xc8] sm:$0xff]
    %v2348 = vld [vmem:[%s4 + $0xd0] sm:$0xff]
    %v2349 = vld [vmem:[%s4 + $0xd8] sm:$0xff]
    %v2350 = vld [vmem:[%s4 + $0xe0] sm:$0xff]
    %v2351 = vld [vmem:[%s4 + $0xe8] sm:$0xff]
    %v2352 = vld [vmem:[%s4 + $0xf0] sm:$0xff]
    %v2353 = vld [vmem:[%s4 + $0xf8] sm:$0xff]
    %v2354 = vld [vmem:[%s4 + $0x100] sm:$0xff]
    %v2355 = vld [vmem:[%s4 + $0x108] sm:$0xff]
    %v2356 = vld [vmem:[%s4 + $0x110] sm:$0xff]
    %v2357 = vld [vmem:[%s4 + $0x118] sm:$0xff]
    %v2358 = vld [vmem:[%s4 + $0x120] sm:$0xff]
    %v2359 = vld [vmem:[%s4 + $0x128] sm:$0xff]
    %v2360 = vld [vmem:[%s4 + $0x130] sm:$0xff]
    %v2361 = vld [vmem:[%s4 + $0x138] sm:$0xff]
    %v2362 = vld [vmem:[%s4 + $0x140] sm:$0xff]
    %v2363 = vld [vmem:[%s4 + $0x148] sm:$0xff]
    %v2364 = vld [vmem:[%s4 + $0x150] sm:$0xff]
    %v2365 = vld [vmem:[%s4 + $0x158] sm:$0xff]
    %v2366 = vld [vmem:[%s4 + $0x160] sm:$0xff]
    %v2367 = vld [vmem:[%s4 + $0x168] sm:$0xff]
    %v2368 = vld [vmem:[%s4 + $0x170] sm:$0xff]
    %v2369 = vld [vmem:[%s4 + $0x178] sm:$0xff]
    %v2370 = vld [vmem:[%s4 + $0x180] sm:$0xff]
    %v2371 = vld [vmem:[%s4 + $0x188] sm:$0xff]
    %v2372 = vld [vmem:[%s4 + $0x190] sm:$0xff]
    %v2373 = vld [vmem:[%s4 + $0x198] sm:$0xff]
    %v2374 = vld [vmem:[%s4 + $0x1a0] sm:$0xff]
    %v2375 = vld [vmem:[%s4 + $0x1a8] sm:$0xff]
    %v2376 = vld [vmem:[%s4 + $0x1b0] sm:$0xff]
    %v2377 = vld [vmem:[%s4 + $0x1b8] sm:$0xff]
    %v2378 = vld [vmem:[%s4 + $0x1c0] sm:$0xff]
    %v2379 = vld [vmem:[%s4 + $0x1c8] sm:$0xff]
    %v2380 = vld [vmem:[%s4 + $0x1d0] sm:$0xff]
    %v2381 = vld [vmem:[%s4 + $0x1d8] sm:$0xff]
    %v2382 = vld [vmem:[%s4 + $0x1e0] sm:$0xff]
    %v2383 = vld [vmem:[%s4 + $0x1e8] sm:$0xff]
    %v2384 = vld [vmem:[%s4 + $0x1f0] sm:$0xff]
    %v2385 = vld [vmem:[%s4 + $0x1f8] sm:$0xff]
    %v2386 = vld [vmem:[%s5] sm:$0xff]
    %v2388 = vperm.slane %v2386, 0
    %v2389 = vperm.slane %v2386, 1
    %v2390 = vperm.slane %v2386, 2
    %v2391 = vperm.slane %v2386, 3
    %v2392 = vperm.slane %v2386, 4
    %v2393 = vperm.slane %v2386, 5
    %v2394 = vperm.slane %v2386, 6
    %v2395 = vperm.slane %v2386, 7
    %v2405 = vsel %vm476, %v2321, 0
    %2407 = vmatpush.msra.mxu0 0.0
    %2408 = vmatpush.msra.mxu0 0.0
    %2409 = vmatpush.msra.mxu0 0.0
    %2410 = vmatpush.msra.mxu0 0.0
    %2411 = vmatpush.msra.mxu0 0.0
    %2412 = vmatpush.msra.mxu0 0.0
    %2413 = vmatpush.msra.mxu0 0.0
    %2414 = vmatpush.msra.mxu0 0.0
    %2415 = vmatpush.msra.mxu0 %v2378
    %2416 = vmatpush.msra.mxu0 %v2370
    %2417 = vmatpush.msra.mxu0 %v2362
    %2418 = vmatpush.msra.mxu0 %v2354
    %2419 = vmatpush.msra.mxu0 %v2346
    %2420 = vmatpush.msra.mxu0 %v2338
    %2421 = vmatpush.msra.mxu0 %v2330
    %2422 = vmatpush.msra.mxu0 %v2322
    %2423 = vmatmul.f32.gmra.mxu0 %v2405
    %v2424 = vpop.f32.mrf.mxu0
    %v2425 = vadd.f32 %v2388, %v2424
    %2426 = vdwg.mxu0
    %2427 = vmatpush.msra.mxu0 0.0
    %2428 = vmatpush.msra.mxu0 0.0
    %2429 = vmatpush.msra.mxu0 0.0
    %2430 = vmatpush.msra.mxu0 0.0
    %2431 = vmatpush.msra.mxu0 0.0
    %2432 = vmatpush.msra.mxu0 0.0
    %2433 = vmatpush.msra.mxu0 0.0
    %2434 = vmatpush.msra.mxu0 0.0
    %2435 = vmatpush.msra.mxu0 %v2379
    %2436 = vmatpush.msra.mxu0 %v2371
    %2437 = vmatpush.msra.mxu0 %v2363
    %2438 = vmatpush.msra.mxu0 %v2355
    %2439 = vmatpush.msra.mxu0 %v2347
    %2440 = vmatpush.msra.mxu0 %v2339
    %2441 = vmatpush.msra.mxu0 %v2331
    %2442 = vmatpush.msra.mxu0 %v2323
    %2443 = vmatmul.f32.gmra.mxu0 %v2405
    %v2444 = vpop.f32.mrf.mxu0
    %v2445 = vadd.f32 %v2389, %v2444
    %2446 = vdwg.mxu0
    %2447 = vmatpush.msra.mxu0 0.0
    %2448 = vmatpush.msra.mxu0 0.0
    %2449 = vmatpush.msra.mxu0 0.0
    %2450 = vmatpush.msra.mxu0 0.0
    %2451 = vmatpush.msra.mxu0 0.0
    %2452 = vmatpush.msra.mxu0 0.0
    %2453 = vmatpush.msra.mxu0 0.0
    %2454 = vmatpush.msra.mxu0 0.0
    %2455 = vmatpush.msra.mxu0 %v2380
    %2456 = vmatpush.msra.mxu0 %v2372
    %2457 = vmatpush.msra.mxu0 %v2364
    %2458 = vmatpush.msra.mxu0 %v2356
    %2459 = vmatpush.msra.mxu0 %v2348
    %2460 = vmatpush.msra.mxu0 %v2340
    %2461 = vmatpush.msra.mxu0 %v2332
    %2462 = vmatpush.msra.mxu0 %v2324
    %2463 = vmatmul.f32.gmra.mxu0 %v2405
    %v2464 = vpop.f32.mrf.mxu0
    %v2465 = vadd.f32 %v2390, %v2464
    %2466 = vdwg.mxu0
    %2467 = vmatpush.msra.mxu0 0.0
    %2468 = vmatpush.msra.mxu0 0.0
    %2469 = vmatpush.msra.mxu0 0.0
    %2470 = vmatpush.msra.mxu0 0.0
    %2471 = vmatpush.msra.mxu0 0.0
    %2472 = vmatpush.msra.mxu0 0.0
    %2473 = vmatpush.msra.mxu0 0.0
    %2474 = vmatpush.msra.mxu0 0.0
    %2475 = vmatpush.msra.mxu0 %v2381
    %2476 = vmatpush.msra.mxu0 %v2373
    %2477 = vmatpush.msra.mxu0 %v2365
    %2478 = vmatpush.msra.mxu0 %v2357
    %2479 = vmatpush.msra.mxu0 %v2349
    %2480 = vmatpush.msra.mxu0 %v2341
    %2481 = vmatpush.msra.mxu0 %v2333
    %2482 = vmatpush.msra.mxu0 %v2325
    %2483 = vmatmul.f32.gmra.mxu0 %v2405
    %v2484 = vpop.f32.mrf.mxu0
    %v2485 = vadd.f32 %v2391, %v2484
    %2486 = vdwg.mxu0
    %2487 = vmatpush.msra.mxu0 0.0
    %2488 = vmatpush.msra.mxu0 0.0
    %2489 = vmatpush.msra.mxu0 0.0
    %2490 = vmatpush.msra.mxu0 0.0
    %2491 = vmatpush.msra.mxu0 0.0
    %2492 = vmatpush.msra.mxu0 0.0
    %2493 = vmatpush.msra.mxu0 0.0
    %2494 = vmatpush.msra.mxu0 0.0
    %2495 = vmatpush.msra.mxu0 %v2382
    %2496 = vmatpush.msra.mxu0 %v2374
    %2497 = vmatpush.msra.mxu0 %v2366
    %2498 = vmatpush.msra.mxu0 %v2358
    %2499 = vmatpush.msra.mxu0 %v2350
    %2500 = vmatpush.msra.mxu0 %v2342
    %2501 = vmatpush.msra.mxu0 %v2334
    %2502 = vmatpush.msra.mxu0 %v2326
    %2503 = vmatmul.f32.gmra.mxu0 %v2405
    %v2504 = vpop.f32.mrf.mxu0
    %v2505 = vadd.f32 %v2392, %v2504
    %2506 = vdwg.mxu0
    %2507 = vmatpush.msra.mxu0 0.0
    %2508 = vmatpush.msra.mxu0 0.0
    %2509 = vmatpush.msra.mxu0 0.0
    %2510 = vmatpush.msra.mxu0 0.0
    %2511 = vmatpush.msra.mxu0 0.0
    %2512 = vmatpush.msra.mxu0 0.0
    %2513 = vmatpush.msra.mxu0 0.0
    %2514 = vmatpush.msra.mxu0 0.0
    %2515 = vmatpush.msra.mxu0 %v2383
    %2516 = vmatpush.msra.mxu0 %v2375
    %2517 = vmatpush.msra.mxu0 %v2367
    %2518 = vmatpush.msra.mxu0 %v2359
    %2519 = vmatpush.msra.mxu0 %v2351
    %2520 = vmatpush.msra.mxu0 %v2343
    %2521 = vmatpush.msra.mxu0 %v2335
    %2522 = vmatpush.msra.mxu0 %v2327
    %2523 = vmatmul.f32.gmra.mxu0 %v2405
    %v2524 = vpop.f32.mrf.mxu0
    %v2525 = vadd.f32 %v2393, %v2524
    %2526 = vdwg.mxu0
    %2527 = vmatpush.msra.mxu0 0.0
    %2528 = vmatpush.msra.mxu0 0.0
    %2529 = vmatpush.msra.mxu0 0.0
    %2530 = vmatpush.msra.mxu0 0.0
    %2531 = vmatpush.msra.mxu0 0.0
    %2532 = vmatpush.msra.mxu0 0.0
    %2533 = vmatpush.msra.mxu0 0.0
    %2534 = vmatpush.msra.mxu0 0.0
    %2535 = vmatpush.msra.mxu0 %v2384
    %2536 = vmatpush.msra.mxu0 %v2376
    %2537 = vmatpush.msra.mxu0 %v2368
    %2538 = vmatpush.msra.mxu0 %v2360
    %2539 = vmatpush.msra.mxu0 %v2352
    %2540 = vmatpush.msra.mxu0 %v2344
    %2541 = vmatpush.msra.mxu0 %v2336
    %2542 = vmatpush.msra.mxu0 %v2328
    %2543 = vmatmul.f32.gmra.mxu0 %v2405
    %v2544 = vpop.f32.mrf.mxu0
    %v2545 = vadd.f32 %v2394, %v2544
    %2546 = vdwg.mxu0
    %2547 = vmatpush.msra.mxu0 0.0
    %2548 = vmatpush.msra.mxu0 0.0
    %2549 = vmatpush.msra.mxu0 0.0
    %2550 = vmatpush.msra.mxu0 0.0
    %2551 = vmatpush.msra.mxu0 0.0
    %2552 = vmatpush.msra.mxu0 0.0
    %2553 = vmatpush.msra.mxu0 0.0
    %2554 = vmatpush.msra.mxu0 0.0
    %2555 = vmatpush.msra.mxu0 %v2385
    %2556 = vmatpush.msra.mxu0 %v2377
    %2557 = vmatpush.msra.mxu0 %v2369
    %2558 = vmatpush.msra.mxu0 %v2361
    %2559 = vmatpush.msra.mxu0 %v2353
    %2560 = vmatpush.msra.mxu0 %v2345
    %2561 = vmatpush.msra.mxu0 %v2337
    %2562 = vmatpush.msra.mxu0 %v2329
    %2563 = vmatmul.f32.gmra.mxu0 %v2405
    %v2564 = vpop.f32.mrf.mxu0
    %v2565 = vadd.f32 %v2395, %v2564
    %2566 = vdwg.mxu0
    %v2567 = vmax.f32 %v2425, 0.0
    %v2568 = vmax.f32 %v2445, 0.0
    %v2569 = vmax.f32 %v2465, 0.0
    %v2570 = vmax.f32 %v2485, 0.0
    %v2571 = vmax.f32 %v2505, 0.0
    %v2572 = vmax.f32 %v2525, 0.0
    %v2573 = vmax.f32 %v2545, 0.0
    %v2574 = vmax.f32 %v2565, 0.0
    %v2575 = vld [vmem:[%s6] sm:$0xff]
    %v2576 = vld [vmem:[%s6 + $0x8] sm:$0xff]
    %v2577 = vld [vmem:[%s6 + $0x10] sm:$0xff]
    %v2578 = vld [vmem:[%s6 + $0x18] sm:$0xff]
    %v2579 = vld [vmem:[%s6 + $0x20] sm:$0xff]
    %v2580 = vld [vmem:[%s6 + $0x28] sm:$0xff]
    %v2581 = vld [vmem:[%s6 + $0x30] sm:$0xff]
    %v2582 = vld [vmem:[%s6 + $0x38] sm:$0xff]
    %v2583 = vld [vmem:[%s6 + $0x40] sm:$0xff]
    %v2584 = vld [vmem:[%s6 + $0x48] sm:$0xff]
    %v2585 = vld [vmem:[%s6 + $0x50] sm:$0xff]
    %v2586 = vld [vmem:[%s6 + $0x58] sm:$0xff]
    %v2587 = vld [vmem:[%s6 + $0x60] sm:$0xff]
    %v2588 = vld [vmem:[%s6 + $0x68] sm:$0xff]
    %v2589 = vld [vmem:[%s6 + $0x70] sm:$0xff]
    %v2590 = vld [vmem:[%s6 + $0x78] sm:$0xff]
    %v2591 = vld [vmem:[%s6 + $0x80] sm:$0xff]
    %v2592 = vld [vmem:[%s6 + $0x88] sm:$0xff]
    %v2593 = vld [vmem:[%s6 + $0x90] sm:$0xff]
    %v2594 = vld [vmem:[%s6 + $0x98] sm:$0xff]
    %v2595 = vld [vmem:[%s6 + $0xa0] sm:$0xff]
    %v2596 = vld [vmem:[%s6 + $0xa8] sm:$0xff]
    %v2597 = vld [vmem:[%s6 + $0xb0] sm:$0xff]
    %v2598 = vld [vmem:[%s6 + $0xb8] sm:$0xff]
    %v2599 = vld [vmem:[%s6 + $0xc0] sm:$0xff]
    %v2600 = vld [vmem:[%s6 + $0xc8] sm:$0xff]
    %v2601 = vld [vmem:[%s6 + $0xd0] sm:$0xff]
    %v2602 = vld [vmem:[%s6 + $0xd8] sm:$0xff]
    %v2603 = vld [vmem:[%s6 + $0xe0] sm:$0xff]
    %v2604 = vld [vmem:[%s6 + $0xe8] sm:$0xff]
    %v2605 = vld [vmem:[%s6 + $0xf0] sm:$0xff]
    %v2606 = vld [vmem:[%s6 + $0xf8] sm:$0xff]
    %v2607 = vld [vmem:[%s6 + $0x100] sm:$0xff]
    %v2608 = vld [vmem:[%s6 + $0x108] sm:$0xff]
    %v2609 = vld [vmem:[%s6 + $0x110] sm:$0xff]
    %v2610 = vld [vmem:[%s6 + $0x118] sm:$0xff]
    %v2611 = vld [vmem:[%s6 + $0x120] sm:$0xff]
    %v2612 = vld [vmem:[%s6 + $0x128] sm:$0xff]
    %v2613 = vld [vmem:[%s6 + $0x130] sm:$0xff]
    %v2614 = vld [vmem:[%s6 + $0x138] sm:$0xff]
    %v2615 = vld [vmem:[%s6 + $0x140] sm:$0xff]
    %v2616 = vld [vmem:[%s6 + $0x148] sm:$0xff]
    %v2617 = vld [vmem:[%s6 + $0x150] sm:$0xff]
    %v2618 = vld [vmem:[%s6 + $0x158] sm:$0xff]
    %v2619 = vld [vmem:[%s6 + $0x160] sm:$0xff]
    %v2620 = vld [vmem:[%s6 + $0x168] sm:$0xff]
    %v2621 = vld [vmem:[%s6 + $0x170] sm:$0xff]
    %v2622 = vld [vmem:[%s6 + $0x178] sm:$0xff]
    %v2623 = vld [vmem:[%s6 + $0x180] sm:$0xff]
    %v2624 = vld [vmem:[%s6 + $0x188] sm:$0xff]
    %v2625 = vld [vmem:[%s6 + $0x190] sm:$0xff]
    %v2626 = vld [vmem:[%s6 + $0x198] sm:$0xff]
    %v2627 = vld [vmem:[%s6 + $0x1a0] sm:$0xff]
    %v2628 = vld [vmem:[%s6 + $0x1a8] sm:$0xff]
    %v2629 = vld [vmem:[%s6 + $0x1b0] sm:$0xff]
    %v2630 = vld [vmem:[%s6 + $0x1b8] sm:$0xff]
    %v2631 = vld [vmem:[%s6 + $0x1c0] sm:$0xff]
    %v2632 = vld [vmem:[%s6 + $0x1c8] sm:$0xff]
    %v2633 = vld [vmem:[%s6 + $0x1d0] sm:$0xff]
    %v2634 = vld [vmem:[%s6 + $0x1d8] sm:$0xff]
    %v2635 = vld [vmem:[%s6 + $0x1e0] sm:$0xff]
    %v2636 = vld [vmem:[%s6 + $0x1e8] sm:$0xff]
    %v2637 = vld [vmem:[%s6 + $0x1f0] sm:$0xff]
    %v2638 = vld [vmem:[%s6 + $0x1f8] sm:$0xff]
    %v2639 = vld [vmem:[%s6 + $0x200] sm:$0xff]
    %v2640 = vld [vmem:[%s6 + $0x208] sm:$0xff]
    %v2641 = vld [vmem:[%s6 + $0x210] sm:$0xff]
    %v2642 = vld [vmem:[%s6 + $0x218] sm:$0xff]
    %v2643 = vld [vmem:[%s6 + $0x220] sm:$0xff]
    %v2644 = vld [vmem:[%s6 + $0x228] sm:$0xff]
    %v2645 = vld [vmem:[%s6 + $0x230] sm:$0xff]
    %v2646 = vld [vmem:[%s6 + $0x238] sm:$0xff]
    %v2647 = vld [vmem:[%s6 + $0x240] sm:$0xff]
    %v2648 = vld [vmem:[%s6 + $0x248] sm:$0xff]
    %v2649 = vld [vmem:[%s6 + $0x250] sm:$0xff]
    %v2650 = vld [vmem:[%s6 + $0x258] sm:$0xff]
    %v2651 = vld [vmem:[%s6 + $0x260] sm:$0xff]
    %v2652 = vld [vmem:[%s6 + $0x268] sm:$0xff]
    %v2653 = vld [vmem:[%s6 + $0x270] sm:$0xff]
    %v2654 = vld [vmem:[%s6 + $0x278] sm:$0xff]
    %v2655 = vld [vmem:[%s6 + $0x280] sm:$0xff]
    %v2656 = vld [vmem:[%s6 + $0x288] sm:$0xff]
    %v2657 = vld [vmem:[%s6 + $0x290] sm:$0xff]
    %v2658 = vld [vmem:[%s6 + $0x298] sm:$0xff]
    %v2659 = vld [vmem:[%s6 + $0x2a0] sm:$0xff]
    %v2660 = vld [vmem:[%s6 + $0x2a8] sm:$0xff]
    %v2661 = vld [vmem:[%s6 + $0x2b0] sm:$0xff]
    %v2662 = vld [vmem:[%s6 + $0x2b8] sm:$0xff]
    %v2663 = vld [vmem:[%s6 + $0x2c0] sm:$0xff]
    %v2664 = vld [vmem:[%s6 + $0x2c8] sm:$0xff]
    %v2665 = vld [vmem:[%s6 + $0x2d0] sm:$0xff]
    %v2666 = vld [vmem:[%s6 + $0x2d8] sm:$0xff]
    %v2667 = vld [vmem:[%s6 + $0x2e0] sm:$0xff]
    %v2668 = vld [vmem:[%s6 + $0x2e8] sm:$0xff]
    %v2669 = vld [vmem:[%s6 + $0x2f0] sm:$0xff]
    %v2670 = vld [vmem:[%s6 + $0x2f8] sm:$0xff]
    %v2671 = vld [vmem:[%s6 + $0x300] sm:$0xff]
    %v2672 = vld [vmem:[%s6 + $0x308] sm:$0xff]
    %v2673 = vld [vmem:[%s6 + $0x310] sm:$0xff]
    %v2674 = vld [vmem:[%s6 + $0x318] sm:$0xff]
    %v2675 = vld [vmem:[%s6 + $0x320] sm:$0xff]
    %v2676 = vld [vmem:[%s6 + $0x328] sm:$0xff]
    %v2677 = vld [vmem:[%s6 + $0x330] sm:$0xff]
    %v2678 = vld [vmem:[%s6 + $0x338] sm:$0xff]
    %v2679 = vld [vmem:[%s6 + $0x340] sm:$0xff]
    %v2680 = vld [vmem:[%s6 + $0x348] sm:$0xff]
    %v2681 = vld [vmem:[%s6 + $0x350] sm:$0xff]
    %v2682 = vld [vmem:[%s6 + $0x358] sm:$0xff]
    %v2683 = vld [vmem:[%s6 + $0x360] sm:$0xff]
    %v2684 = vld [vmem:[%s6 + $0x368] sm:$0xff]
    %v2685 = vld [vmem:[%s6 + $0x370] sm:$0xff]
    %v2686 = vld [vmem:[%s6 + $0x378] sm:$0xff]
    %v2687 = vld [vmem:[%s6 + $0x380] sm:$0xff]
    %v2688 = vld [vmem:[%s6 + $0x388] sm:$0xff]
    %v2689 = vld [vmem:[%s6 + $0x390] sm:$0xff]
    %v2690 = vld [vmem:[%s6 + $0x398] sm:$0xff]
    %v2691 = vld [vmem:[%s6 + $0x3a0] sm:$0xff]
    %v2692 = vld [vmem:[%s6 + $0x3a8] sm:$0xff]
    %v2693 = vld [vmem:[%s6 + $0x3b0] sm:$0xff]
    %v2694 = vld [vmem:[%s6 + $0x3b8] sm:$0xff]
    %v2695 = vld [vmem:[%s6 + $0x3c0] sm:$0xff]
    %v2696 = vld [vmem:[%s6 + $0x3c8] sm:$0xff]
    %v2697 = vld [vmem:[%s6 + $0x3d0] sm:$0xff]
    %v2698 = vld [vmem:[%s6 + $0x3d8] sm:$0xff]
    %v2699 = vld [vmem:[%s6 + $0x3e0] sm:$0xff]
    %v2700 = vld [vmem:[%s6 + $0x3e8] sm:$0xff]
    %v2701 = vld [vmem:[%s6 + $0x3f0] sm:$0xff]
    %v2702 = vld [vmem:[%s6 + $0x3f8] sm:$0xff]
    %v2703 = vld [vmem:[%s7] sm:$0x1]
    %v2705 = vperm.slane %v2703, 0
    %2707 = vmatpush.msra.mxu0 %v2590
    %2708 = vmatpush.msra.mxu0 %v2589
    %2709 = vmatpush.msra.mxu0 %v2588
    %2710 = vmatpush.msra.mxu0 %v2587
    %2711 = vmatpush.msra.mxu0 %v2586
    %2712 = vmatpush.msra.mxu0 %v2585
    %2713 = vmatpush.msra.mxu0 %v2584
    %2714 = vmatpush.msra.mxu0 %v2583
    %2715 = vmatpush.msra.mxu0 %v2582
    %2716 = vmatpush.msra.mxu0 %v2581
    %2717 = vmatpush.msra.mxu0 %v2580
    %2718 = vmatpush.msra.mxu0 %v2579
    %2719 = vmatpush.msra.mxu0 %v2578
    %2720 = vmatpush.msra.mxu0 %v2577
    %2721 = vmatpush.msra.mxu0 %v2576
    %2722 = vmatpush.msra.mxu0 %v2575
    %2723 = vmatmul.f32.gmra.mxu0 %v2567
    %v2724 = vpop.f32.mrf.mxu0
    %v2725 = vadd.f32 %v2705, %v2724
    %2726 = vdwg.mxu0
    %2727 = vmatpush.msra.mxu0 %v2606
    %2728 = vmatpush.msra.mxu0 %v2605
    %2729 = vmatpush.msra.mxu0 %v2604
    %2730 = vmatpush.msra.mxu0 %v2603
    %2731 = vmatpush.msra.mxu0 %v2602
    %2732 = vmatpush.msra.mxu0 %v2601
    %2733 = vmatpush.msra.mxu0 %v2600
    %2734 = vmatpush.msra.mxu0 %v2599
    %2735 = vmatpush.msra.mxu0 %v2598
    %2736 = vmatpush.msra.mxu0 %v2597
    %2737 = vmatpush.msra.mxu0 %v2596
    %2738 = vmatpush.msra.mxu0 %v2595
    %2739 = vmatpush.msra.mxu0 %v2594
    %2740 = vmatpush.msra.mxu0 %v2593
    %2741 = vmatpush.msra.mxu0 %v2592
    %2742 = vmatpush.msra.mxu0 %v2591
    %2743 = vmatmul.f32.gmra.mxu0 %v2568
    %v2744 = vpop.f32.mrf.mxu0
    %v2745 = vadd.f32 %v2725, %v2744
    %2746 = vdwg.mxu0
    %2747 = vmatpush.msra.mxu0 %v2622
    %2748 = vmatpush.msra.mxu0 %v2621
    %2749 = vmatpush.msra.mxu0 %v2620
    %2750 = vmatpush.msra.mxu0 %v2619
    %2751 = vmatpush.msra.mxu0 %v2618
    %2752 = vmatpush.msra.mxu0 %v2617
    %2753 = vmatpush.msra.mxu0 %v2616
    %2754 = vmatpush.msra.mxu0 %v2615
    %2755 = vmatpush.msra.mxu0 %v2614
    %2756 = vmatpush.msra.mxu0 %v2613
    %2757 = vmatpush.msra.mxu0 %v2612
    %2758 = vmatpush.msra.mxu0 %v2611
    %2759 = vmatpush.msra.mxu0 %v2610
    %2760 = vmatpush.msra.mxu0 %v2609
    %2761 = vmatpush.msra.mxu0 %v2608
    %2762 = vmatpush.msra.mxu0 %v2607
    %2763 = vmatmul.f32.gmra.mxu0 %v2569
    %v2764 = vpop.f32.mrf.mxu0
    %v2765 = vadd.f32 %v2745, %v2764
    %2766 = vdwg.mxu0
    %2767 = vmatpush.msra.mxu0 %v2638
    %2768 = vmatpush.msra.mxu0 %v2637
    %2769 = vmatpush.msra.mxu0 %v2636
    %2770 = vmatpush.msra.mxu0 %v2635
    %2771 = vmatpush.msra.mxu0 %v2634
    %2772 = vmatpush.msra.mxu0 %v2633
    %2773 = vmatpush.msra.mxu0 %v2632
    %2774 = vmatpush.msra.mxu0 %v2631
    %2775 = vmatpush.msra.mxu0 %v2630
    %2776 = vmatpush.msra.mxu0 %v2629
    %2777 = vmatpush.msra.mxu0 %v2628
    %2778 = vmatpush.msra.mxu0 %v2627
    %2779 = vmatpush.msra.mxu0 %v2626
    %2780 = vmatpush.msra.mxu0 %v2625
    %2781 = vmatpush.msra.mxu0 %v2624
    %2782 = vmatpush.msra.mxu0 %v2623
    %2783 = vmatmul.f32.gmra.mxu0 %v2570
    %v2784 = vpop.f32.mrf.mxu0
    %v2785 = vadd.f32 %v2765, %v2784
    %2786 = vdwg.mxu0
    %2787 = vmatpush.msra.mxu0 %v2654
    %2788 = vmatpush.msra.mxu0 %v2653
    %2789 = vmatpush.msra.mxu0 %v2652
    %2790 = vmatpush.msra.mxu0 %v2651
    %2791 = vmatpush.msra.mxu0 %v2650
    %2792 = vmatpush.msra.mxu0 %v2649
    %2793 = vmatpush.msra.mxu0 %v2648
    %2794 = vmatpush.msra.mxu0 %v2647
    %2795 = vmatpush.msra.mxu0 %v2646
    %2796 = vmatpush.msra.mxu0 %v2645
    %2797 = vmatpush.msra.mxu0 %v2644
    %2798 = vmatpush.msra.mxu0 %v2643
    %2799 = vmatpush.msra.mxu0 %v2642
    %2800 = vmatpush.msra.mxu0 %v2641
    %2801 = vmatpush.msra.mxu0 %v2640
    %2802 = vmatpush.msra.mxu0 %v2639
    %2803 = vmatmul.f32.gmra.mxu0 %v2571
    %v2804 = vpop.f32.mrf.mxu0
    %v2805 = vadd.f32 %v2785, %v2804
    %2806 = vdwg.mxu0
    %2807 = vmatpush.msra.mxu0 %v2670
    %2808 = vmatpush.msra.mxu0 %v2669
    %2809 = vmatpush.msra.mxu0 %v2668
    %2810 = vmatpush.msra.mxu0 %v2667
    %2811 = vmatpush.msra.mxu0 %v2666
    %2812 = vmatpush.msra.mxu0 %v2665
    %2813 = vmatpush.msra.mxu0 %v2664
    %2814 = vmatpush.msra.mxu0 %v2663
    %2815 = vmatpush.msra.mxu0 %v2662
    %2816 = vmatpush.msra.mxu0 %v2661
    %2817 = vmatpush.msra.mxu0 %v2660
    %2818 = vmatpush.msra.mxu0 %v2659
    %2819 = vmatpush.msra.mxu0 %v2658
    %2820 = vmatpush.msra.mxu0 %v2657
    %2821 = vmatpush.msra.mxu0 %v2656
    %2822 = vmatpush.msra.mxu0 %v2655
    %2823 = vmatmul.f32.gmra.mxu0 %v2572
    %v2824 = vpop.f32.mrf.mxu0
    %v2825 = vadd.f32 %v2805, %v2824
    %2826 = vdwg.mxu0
    %2827 = vmatpush.msra.mxu0 %v2686
    %2828 = vmatpush.msra.mxu0 %v2685
    %2829 = vmatpush.msra.mxu0 %v2684
    %2830 = vmatpush.msra.mxu0 %v2683
    %2831 = vmatpush.msra.mxu0 %v2682
    %2832 = vmatpush.msra.mxu0 %v2681
    %2833 = vmatpush.msra.mxu0 %v2680
    %2834 = vmatpush.msra.mxu0 %v2679
    %2835 = vmatpush.msra.mxu0 %v2678
    %2836 = vmatpush.msra.mxu0 %v2677
    %2837 = vmatpush.msra.mxu0 %v2676
    %2838 = vmatpush.msra.mxu0 %v2675
    %2839 = vmatpush.msra.mxu0 %v2674
    %2840 = vmatpush.msra.mxu0 %v2673
    %2841 = vmatpush.msra.mxu0 %v2672
    %2842 = vmatpush.msra.mxu0 %v2671
    %2843 = vmatmul.f32.gmra.mxu0 %v2573
    %v2844 = vpop.f32.mrf.mxu0
    %v2845 = vadd.f32 %v2825, %v2844
    %2846 = vdwg.mxu0
    %2847 = vmatpush.msra.mxu0 %v2702
    %2848 = vmatpush.msra.mxu0 %v2701
    %2849 = vmatpush.msra.mxu0 %v2700
    %2850 = vmatpush.msra.mxu0 %v2699
    %2851 = vmatpush.msra.mxu0 %v2698
    %2852 = vmatpush.msra.mxu0 %v2697
    %2853 = vmatpush.msra.mxu0 %v2696
    %2854 = vmatpush.msra.mxu0 %v2695
    %2855 = vmatpush.msra.mxu0 %v2694
    %2856 = vmatpush.msra.mxu0 %v2693
    %2857 = vmatpush.msra.mxu0 %v2692
    %2858 = vmatpush.msra.mxu0 %v2691
    %2859 = vmatpush.msra.mxu0 %v2690
    %2860 = vmatpush.msra.mxu0 %v2689
    %2861 = vmatpush.msra.mxu0 %v2688
    %2862 = vmatpush.msra.mxu0 %v2687
    %2863 = vmatmul.f32.gmra.mxu0 %v2574
    %v2864 = vpop.f32.mrf.mxu0
    %v2865 = vadd.f32 %v2845, %v2864
    %2866 = vdwg.mxu0
    %2868 = vrot.lane.b32.xlu0 %v2865, 127
    %v2869 = vpop.permute.xlu0 %2868
    %vm2871 = vcmask 41984
    %v2872 = vsel %vm2871, %v2869, 0.0
    %2873 = vadd.xlane.f32.xlu0 %v2872
    %v2874 = vpop.xlane.xlu0 %2873
    %v2875 = vrot.slane %v2874, 4
    %v2876 = vadd.f32 %v2874, %v2875
    %v2877 = vrot.slane %v2876, 2
    %v2878 = vadd.f32 %v2876, %v2877
    %v2879 = vrot.slane %v2878, 1
    %v2880 = vadd.f32 %v2878, %v2879
    %s2881 = vtos %v2880
    %v2882 = vstv %s2881
    %v2883 = vrcp.pop 12.0
    %v2884 = vmul.f32 12.0, %v2883
    %v2885 = vsub.f32 1.0, %v2884
    %v2886 = vmul.f32 %v2883, %v2885
    %v2887 = vadd.f32 %v2883, %v2886
    %vm2888 = vweird.f32 %v2883
    %v2889 = vsel %vm2888, %v2883, %v2887
    %v2890 = vmul.f32 %v2882, %v2889
    %v2891 = vsub.f32 %v2865, %v2890
    %2892 = vset.pattern.permute.xlu0 0
    %2893 = vperm.xlu0 %2892, %v2865
    %v2894 = vpop.permute.xlu0 %2893
    %v2896 = vadd.f32 %v2894, %v2891
    %2898 = vrot.lane.b32.xlu0 %v2896, 127
    %v2899 = vpop.permute.xlu0 %2898
    %2901 = vst.msk [vmem:[#allocation2] sm:$0x3] %vm2871, %v2899
    // Predicated region
    $region34: #{conv_dueling_forward.1} parent=1 // pred_check
      _
    $region35: #{conv_dueling_forward.1} parent=1 // pred_check_branch
      %2903 = sbr.rel (0) target = $region37
    $region36: #{conv_dueling_forward.1} parent=1 // pred_region
      %2905 = vsyncadd [#allocation3], 0
      %s2907 = sshll.u32 [#allocation2], 4
      %s2908 = int_to_ptr.vmem [resolvable:$true] %s2907
      %s2909 = sshll.u32 %s8, 4
      %s2910 = int_to_ptr.hbm [resolvable:$true] %s2909
      %2912 = dma.vmem_to_hbm [thread:$0]  %s2908, 32, %s2910, [#allocation3]
    $region37: #{conv_dueling_forward.1} parent=1 // pred_fallthru
      _
    // Predicated region
    $region38: #{conv_dueling_forward.1} parent=1 // pred_check
      _
    $region39: #{conv_dueling_forward.1} parent=1 // pred_check_branch
      %2914 = sbr.rel (0) target = $region41
    $region40: #{conv_dueling_forward.1} parent=1 // pred_region
      %2916 = dma.done [#allocation3], 32
    $region41: #{conv_dueling_forward.1} parent=1 // pred_fallthru
      _
    %2917 = vsyncpa [#allocation3], 1

</llo_original>
